<compile_context>
chip_gen: v7x
topology: tpu7x:2x2x1
jax: 0.10.0
libtpu: 0.0.40
codegen_flags: <defaults>
</compile_context>

<pallas_src>
import numpy as np
import jax
import jax.numpy as jnp
from jax.experimental import pallas as pl
from jax.experimental.pallas import tpu as pltpu


C_IN, C_LOW, C_HIGH, INTER, EMB = 4, 16, 32, 32, 32
C_CAT = EMB + 1  # fused out (32) + sal (1) classifier channels


# ----------------------------------------------------------------------------
# Host-side constant operators (numpy, baked in at trace time)
# ----------------------------------------------------------------------------
def _bilinear_matrix_np(dst, src):
    """PyTorch F.interpolate(mode='bilinear', align_corners=False) as a (dst, src)
    matrix. Valid for dst >= src (upsampling / identity), which is all this model uses."""
    assert dst >= src, "only the upsampling case of align_corners=False is implemented"
    scale = src / dst
    i = np.arange(dst, dtype=np.float64)
    src_idx = np.maximum((i + 0.5) * scale - 0.5, 0.0)
    i0 = np.minimum(np.floor(src_idx).astype(np.int64), src - 1)
    i1 = np.minimum(i0 + 1, src - 1)
    lam = src_idx - i0
    W = np.zeros((dst, src), dtype=np.float32)
    W[np.arange(dst), i0] += (1.0 - lam).astype(np.float32)
    W[np.arange(dst), i1] += lam.astype(np.float32)
    return W


def _stride_select_matrix(H, W, s):
    """(H*W, (H//s)*(W//s)) 0/1 matrix: X_flat @ M == X[::s, ::s] flattened (row-major)."""
    Hd, Wd = H // s, W // s
    M = np.zeros((H * W, Hd * Wd), dtype=np.float32)
    hs = np.arange(Hd) * s
    ws = np.arange(Wd) * s
    src = (hs[:, None] * W + ws[None, :]).reshape(-1)
    M[src, np.arange(Hd * Wd)] = 1.0
    return M


# ----------------------------------------------------------------------------
# Fused kernel: backbone + LRASPP head + both upsamples, one batch element per step
# ----------------------------------------------------------------------------
def _fused_lraspp_kernel(x_ref, sel2_ref, sellh_ref,
                         w1t_ref, b1_ref, w2t_ref, b2_ref,
                         wcbrt_ref, bnb_ref, wsct_ref,
                         wlowt_ref, bcat_ref, whight_ref,
                         klow_ref, khigh_ref, o_ref):
    f32 = jnp.float32
    x = x_ref[0]                                                      # (C_IN, H*W)

    # in-kernel stride-2 spatial subsampling (selection matmul keeps pixels lane-dense)
    x2 = jnp.dot(x, sel2_ref[...], preferred_element_type=f32)       # (C_IN, S_l)

    # backbone stage 1: stride-2 1x1 conv + ReLU
    low = jnp.maximum(
        jnp.dot(w1t_ref[...], x2, preferred_element_type=f32) + b1_ref[...], 0.0)     # (C_LOW, S_l)

    # backbone stage 2: 1x1 conv + ReLU are pointwise, so the second stride-2 can
    # subsample `low` directly (identical to running stage 1 on x[::4, ::4]).
    low_s = jnp.dot(low, sellh_ref[...], preferred_element_type=f32)                  # (C_LOW, S_h)
    high = jnp.maximum(
        jnp.dot(w2t_ref[...], low_s, preferred_element_type=f32) + b2_ref[...], 0.0)  # (C_HIGH, S_h)

    # LRASPP head: ConvBNReLU branch (BN scale pre-folded into the conv weight)
    cbr = jnp.maximum(
        jnp.dot(wcbrt_ref[...], high, preferred_element_type=f32) + bnb_ref[...], 0.0)  # (INTER, S_h)

    # global-avg-pool -> 1x1 conv (no bias) -> sigmoid scale  (pool first: linear ops commute)
    m = jnp.mean(high, axis=1, keepdims=True)                         # (C_HIGH, 1)
    s = jnp.dot(wsct_ref[...], m, preferred_element_type=f32)         # (INTER, 1)
    s = 1.0 / (1.0 + jnp.exp(-s))                                     # sigmoid (EUP)
    z = cbr * s                                                       # (INTER, S_h)

    # fused out+sal classifiers (low path carries both biases; bilinear preserves consts)
    lcls = jnp.dot(wlowt_ref[...], low, preferred_element_type=f32) + bcat_ref[...]   # (C_CAT, S_l)
    hcls = jnp.dot(whight_ref[...], z, preferred_element_type=f32)                    # (C_CAT, S_h)

    # composed separable bilinear upsample, one lane-dense matmul per path
    res = (jnp.dot(lcls, klow_ref[...], preferred_element_type=f32)
           + jnp.dot(hcls, khigh_ref[...], preferred_element_type=f32))               # (C_CAT, H*W)
    o_ref[0] = res.astype(o_ref.dtype)


def lraspp_forward(x_nchw, p):
    N, C, H, W = x_nchw.shape
    assert C == C_IN and H % 4 == 0 and W % 4 == 0, "H, W must be multiples of 4"
    Hl, Wl, Hh, Wh = H // 2, W // 2, H // 4, W // 4
    S, S_l, S_h = H * W, Hl * Wl, Hh * Wh

    # ---- constant operators (trace-time numpy -> jit constants) ----
    sel2 = jnp.asarray(_stride_select_matrix(H, W, 2))                     # (S,   S_l)
    sellh = jnp.asarray(_stride_select_matrix(Hl, Wl, 2))                  # (S_l, S_h)
    up_h1 = _bilinear_matrix_np(Hl, Hh)   # decoder upsample  H/4 -> H/2
    up_w1 = _bilinear_matrix_np(Wl, Wh)
    up_h2 = _bilinear_matrix_np(H, Hl)    # final upsample    H/2 -> H
    up_w2 = _bilinear_matrix_np(W, Wl)
    k_low = jnp.asarray(np.kron(up_h2, up_w2).T.astype(np.float32))        # (S_l, S)
    k_high = jnp.asarray(np.kron(up_h2 @ up_h1, up_w2 @ up_w1).T.astype(np.float32))  # (S_h, S)

    # ---- channels-first packed weights (tiny trace-time ops) ----
    w1t = p["w_bb1"].T
    b1 = p["b_bb1"].reshape(C_LOW, 1)
    w2t = p["w_bb2"].T
    b2 = p["b_bb2"].reshape(C_HIGH, 1)
    wcbrt = p["w_cbr"].T * p["bn_scale"].reshape(INTER, 1)                 # BN scale folded
    bnb = p["bn_bias"].reshape(INTER, 1)
    wsct = p["w_scale"].T
    wlowt = jnp.concatenate([p["w_low_out"], p["w_low_sal"]], axis=1).T    # (C_CAT, C_LOW)
    whight = jnp.concatenate([p["w_high_out"], p["w_high_sal"]], axis=1).T  # (C_CAT, INTER)
    bcat = (jnp.concatenate([p["b_low_out"], p["b_low_sal"]])
            + jnp.concatenate([p["b_high_out"], p["b_high_sal"]])).reshape(C_CAT, 1)

    x_flat = x_nchw.reshape(N, C_IN, S)

    def full(arr):  # whole-array block, re-used (no re-DMA) across all grid steps
        return pl.BlockSpec(arr.shape, lambda n: (0,) * arr.ndim)

    y = pl.pallas_call(
        _fused_lraspp_kernel,
        out_shape=jax.ShapeDtypeStruct((N, C_CAT, S), jnp.float32),
        grid=(N,),
        in_specs=[
            pl.BlockSpec((1, C_IN, S), lambda n: (n, 0, 0)),
            full(sel2), full(sellh),
            full(w1t), full(b1), full(w2t), full(b2),
            full(wcbrt), full(bnb), full(wsct),
            full(wlowt), full(bcat), full(whight),
            full(k_low), full(k_high),
        ],
        out_specs=pl.BlockSpec((1, C_CAT, S), lambda n: (n, 0, 0)),
        compiler_params=pltpu.CompilerParams(dimension_semantics=("parallel",)),
    )(x_flat, sel2, sellh, w1t, b1, w2t, b2, wcbrt, bnb, wsct,
      wlowt, bcat, whight, k_low, k_high)

    y = y.reshape(N, C_CAT, H, W)
    out = y[:, :EMB]                                   # (N, EMB, H, W)
    sal = jnp.squeeze(y[:, EMB:EMB + 1])               # torch .squeeze() semantics
    return out, sal


forward = jax.jit(lraspp_forward)


# ----------------------------------------------------------------------------
# Parameters (distinct PRNG keys)
# ----------------------------------------------------------------------------
def init_params(key):
    ks = jax.random.split(key, 18)
    n = lambda k, s: 0.1 * jax.random.normal(k, s, jnp.float32)
    gamma = 1.0 + n(ks[14], (INTER,))
    beta = n(ks[15], (INTER,))
    mean = n(ks[16], (INTER,))
    var = 1.0 + 0.1 * jnp.abs(jax.random.normal(ks[17], (INTER,), jnp.float32))
    bn_scale = gamma / jnp.sqrt(var + 1e-5)
    bn_bias = beta - mean * bn_scale
    return dict(
        w_bb1=n(ks[0], (C_IN, C_LOW)),     b_bb1=n(ks[1], (C_LOW,)),
        w_bb2=n(ks[2], (C_LOW, C_HIGH)),   b_bb2=n(ks[3], (C_HIGH,)),
        w_cbr=n(ks[4], (C_HIGH, INTER)),   bn_scale=bn_scale, bn_bias=bn_bias,
        w_scale=n(ks[5], (C_HIGH, INTER)),
        w_low_out=n(ks[6], (C_LOW, EMB)),  b_low_out=n(ks[7], (EMB,)),
        w_high_out=n(ks[8], (INTER, EMB)), b_high_out=n(ks[9], (EMB,)),
        w_low_sal=n(ks[10], (C_LOW, 1)),   b_low_sal=n(ks[11], (1,)),
        w_high_sal=n(ks[12], (INTER, 1)),  b_high_sal=n(ks[13], (1,)),
    )


# ----------------------------------------------------------------------------
# Pure-JAX staged reference (literal translation of the module), for validation
# ----------------------------------------------------------------------------
def reference_forward(x, p):
    N, _, H, W = x.shape
    Hl, Wl = H // 2, W // 2

    def conv1x1(t, w, b=None):
        y = jnp.einsum("nchw,cd->ndhw", t, w)
        if b is not None:
            y = y + b[None, :, None, None]
        return y

    def up(t, Hd, Wd):
        A = jnp.asarray(_bilinear_matrix_np(Hd, t.shape[2]))
        B = jnp.asarray(_bilinear_matrix_np(Wd, t.shape[3]))
        return jnp.einsum("yh,nchw,vw->ncyv", A, t, B)

    # backbone (stride-2 1x1 conv + ReLU, twice)
    low = jax.nn.relu(conv1x1(x[:, :, ::2, ::2], p["w_bb1"], p["b_bb1"]))
    high = jax.nn.relu(conv1x1(low[:, :, ::2, ::2], p["w_bb2"], p["b_bb2"]))

    # LRASPP decoder
    cbr = jax.nn.relu(conv1x1(high, p["w_cbr"]) * p["bn_scale"][None, :, None, None]
                      + p["bn_bias"][None, :, None, None])
    pooled = jnp.mean(high, axis=(2, 3), keepdims=True)
    s = jax.nn.sigmoid(conv1x1(pooled, p["w_scale"]))
    xh = up(cbr * s, Hl, Wl)
    out = conv1x1(low, p["w_low_out"], p["b_low_out"]) + conv1x1(xh, p["w_high_out"], p["b_high_out"])
    sal = conv1x1(low, p["w_low_sal"], p["b_low_sal"]) + conv1x1(xh, p["w_high_sal"], p["b_high_sal"])

    # final upsample to input resolution
    out = up(out, H, W)
    sal = up(sal, H, W)
    return out, jnp.squeeze(sal)


if __name__ == "__main__":
    key = jax.random.PRNGKey(0)
    kx, kp = jax.random.split(key)
    x = jax.random.normal(kx, (2, C_IN, 16, 16), jnp.float32)   # NCHW, like PyTorch
    params = init_params(kp)

    out, sal = forward(x, params)
    out, sal = jax.block_until_ready(out), jax.block_until_ready(sal)

    assert out.shape == (2, EMB, 16, 16), out.shape
    assert sal.shape == (2, 16, 16), sal.shape
    assert bool(jnp.all(jnp.isfinite(out))) and bool(jnp.all(jnp.isfinite(sal)))

    ref_out, ref_sal = reference_forward(x, params)
    np.testing.assert_allclose(np.asarray(out), np.asarray(ref_out), atol=2e-4, rtol=2e-4)
    np.testing.assert_allclose(np.asarray(sal), np.asarray(ref_sal), atol=2e-4, rtol=2e-4)

    print("KERNEL_OK")
</pallas_src>

<mosaic_0001>
module attributes {stable_mosaic.version = 11 : i64} {
  func.func @_fused_lraspp_kernel(%arg0: i32, %arg1: memref<1x4x256xf32, #tpu.memory_space<vmem>>, %arg2: memref<256x64xf32, #tpu.memory_space<vmem>>, %arg3: memref<64x16xf32, #tpu.memory_space<vmem>>, %arg4: memref<16x4xf32, #tpu.memory_space<vmem>>, %arg5: memref<16x1xf32, #tpu.memory_space<vmem>>, %arg6: memref<32x16xf32, #tpu.memory_space<vmem>>, %arg7: memref<32x1xf32, #tpu.memory_space<vmem>>, %arg8: memref<32x32xf32, #tpu.memory_space<vmem>>, %arg9: memref<32x1xf32, #tpu.memory_space<vmem>>, %arg10: memref<32x32xf32, #tpu.memory_space<vmem>>, %arg11: memref<33x16xf32, #tpu.memory_space<vmem>>, %arg12: memref<33x1xf32, #tpu.memory_space<vmem>>, %arg13: memref<33x32xf32, #tpu.memory_space<vmem>>, %arg14: memref<64x256xf32, #tpu.memory_space<vmem>>, %arg15: memref<16x256xf32, #tpu.memory_space<vmem>>, %arg16: memref<1x33x256xf32, #tpu.memory_space<vmem>>) attributes {dimension_semantics = [#tpu.dimension_semantics<parallel>], iteration_bounds = array<i64: 2>, scalar_prefetch = 0 : i64, scratch_operands = 0 : i64, tpu.core_type = #tpu.core_type<tc>, window_params = [{transform_indices = @transform_0, window_bounds = array<i64: 1, 4, 256>}, {pipeline_mode = #tpu.pipeline_mode<synchronous>, transform_indices = @transform_1, window_bounds = array<i64: 256, 64>}, {pipeline_mode = #tpu.pipeline_mode<synchronous>, transform_indices = @transform_2, window_bounds = array<i64: 64, 16>}, {pipeline_mode = #tpu.pipeline_mode<synchronous>, transform_indices = @transform_3, window_bounds = array<i64: 16, 4>}, {pipeline_mode = #tpu.pipeline_mode<synchronous>, transform_indices = @transform_4, window_bounds = array<i64: 16, 1>}, {pipeline_mode = #tpu.pipeline_mode<synchronous>, transform_indices = @transform_5, window_bounds = array<i64: 32, 16>}, {pipeline_mode = #tpu.pipeline_mode<synchronous>, transform_indices = @transform_6, window_bounds = array<i64: 32, 1>}, {pipeline_mode = #tpu.pipeline_mode<synchronous>, transform_indices = @transform_7, window_bounds = array<i64: 32, 32>}, {pipeline_mode = #tpu.pipeline_mode<synchronous>, transform_indices = @transform_8, window_bounds = array<i64: 32, 1>}, {pipeline_mode = #tpu.pipeline_mode<synchronous>, transform_indices = @transform_9, window_bounds = array<i64: 32, 32>}, {pipeline_mode = #tpu.pipeline_mode<synchronous>, transform_indices = @transform_10, window_bounds = array<i64: 33, 16>}, {pipeline_mode = #tpu.pipeline_mode<synchronous>, transform_indices = @transform_11, window_bounds = array<i64: 33, 1>}, {pipeline_mode = #tpu.pipeline_mode<synchronous>, transform_indices = @transform_12, window_bounds = array<i64: 33, 32>}, {pipeline_mode = #tpu.pipeline_mode<synchronous>, transform_indices = @transform_13, window_bounds = array<i64: 64, 256>}, {pipeline_mode = #tpu.pipeline_mode<synchronous>, transform_indices = @transform_14, window_bounds = array<i64: 16, 256>}, {transform_indices = @transform_15, window_bounds = array<i64: 1, 33, 256>}]} {
    %c0 = arith.constant 0 : index
    %c0_0 = arith.constant 0 : index
    %c0_1 = arith.constant 0 : index
    %0 = vector.load %arg1[%c0, %c0_0, %c0_1] : memref<1x4x256xf32, #tpu.memory_space<vmem>>, vector<1x4x256xf32>
    %1 = vector.shape_cast %0 : vector<1x4x256xf32> to vector<4x256xf32>
    %c0_2 = arith.constant 0 : index
    %c0_3 = arith.constant 0 : index
    %2 = vector.load %arg2[%c0_2, %c0_3] : memref<256x64xf32, #tpu.memory_space<vmem>>, vector<256x64xf32>
    %cst = arith.constant dense<0.000000e+00> : vector<4x64xf32>
    %3 = tpu.matmul %1, %2, %cst {dimension_numbers = #tpu.dot_dimension_numbers<[1], [0], [0], [1], [0, 0, 1, 1], [], []>} : vector<4x256xf32>, vector<256x64xf32>, vector<4x64xf32> -> vector<4x64xf32>
    %c0_4 = arith.constant 0 : index
    %c0_5 = arith.constant 0 : index
    %4 = vector.load %arg4[%c0_4, %c0_5] : memref<16x4xf32, #tpu.memory_space<vmem>>, vector<16x4xf32>
    %cst_6 = arith.constant dense<0.000000e+00> : vector<16x64xf32>
    %5 = tpu.matmul %4, %3, %cst_6 {dimension_numbers = #tpu.dot_dimension_numbers<[1], [0], [0], [1], [0, 0, 1, 1], [], []>} : vector<16x4xf32>, vector<4x64xf32>, vector<16x64xf32> -> vector<16x64xf32>
    %c0_7 = arith.constant 0 : index
    %c0_8 = arith.constant 0 : index
    %6 = vector.load %arg5[%c0_7, %c0_8] : memref<16x1xf32, #tpu.memory_space<vmem>>, vector<16x1xf32>
    %7 = vector.broadcast %6 : vector<16x1xf32> to vector<16x64xf32>
    %8 = arith.addf %5, %7 : vector<16x64xf32>
    %cst_9 = arith.constant 0.000000e+00 : f32
    %9 = vector.broadcast %cst_9 : f32 to vector<16x64xf32>
    %10 = arith.maximumf %8, %9 : vector<16x64xf32>
    %c0_10 = arith.constant 0 : index
    %c0_11 = arith.constant 0 : index
    %11 = vector.load %arg3[%c0_10, %c0_11] : memref<64x16xf32, #tpu.memory_space<vmem>>, vector<64x16xf32>
    %cst_12 = arith.constant dense<0.000000e+00> : vector<16x16xf32>
    %12 = tpu.matmul %10, %11, %cst_12 {dimension_numbers = #tpu.dot_dimension_numbers<[1], [0], [0], [1], [0, 0, 1, 1], [], []>} : vector<16x64xf32>, vector<64x16xf32>, vector<16x16xf32> -> vector<16x16xf32>
    %c0_13 = arith.constant 0 : index
    %c0_14 = arith.constant 0 : index
    %13 = vector.load %arg6[%c0_13, %c0_14] : memref<32x16xf32, #tpu.memory_space<vmem>>, vector<32x16xf32>
    %cst_15 = arith.constant dense<0.000000e+00> : vector<32x16xf32>
    %14 = tpu.matmul %13, %12, %cst_15 {dimension_numbers = #tpu.dot_dimension_numbers<[1], [0], [0], [1], [0, 0, 1, 1], [], []>} : vector<32x16xf32>, vector<16x16xf32>, vector<32x16xf32> -> vector<32x16xf32>
    %c0_16 = arith.constant 0 : index
    %c0_17 = arith.constant 0 : index
    %15 = vector.load %arg7[%c0_16, %c0_17] : memref<32x1xf32, #tpu.memory_space<vmem>>, vector<32x1xf32>
    %16 = vector.broadcast %15 : vector<32x1xf32> to vector<32x16xf32>
    %17 = arith.addf %14, %16 : vector<32x16xf32>
    %cst_18 = arith.constant 0.000000e+00 : f32
    %18 = vector.broadcast %cst_18 : f32 to vector<32x16xf32>
    %19 = arith.maximumf %17, %18 : vector<32x16xf32>
    %c0_19 = arith.constant 0 : index
    %c0_20 = arith.constant 0 : index
    %20 = vector.load %arg8[%c0_19, %c0_20] : memref<32x32xf32, #tpu.memory_space<vmem>>, vector<32x32xf32>
    %cst_21 = arith.constant dense<0.000000e+00> : vector<32x16xf32>
    %21 = tpu.matmul %20, %19, %cst_21 {dimension_numbers = #tpu.dot_dimension_numbers<[1], [0], [0], [1], [0, 0, 1, 1], [], []>} : vector<32x32xf32>, vector<32x16xf32>, vector<32x16xf32> -> vector<32x16xf32>
    %c0_22 = arith.constant 0 : index
    %c0_23 = arith.constant 0 : index
    %22 = vector.load %arg9[%c0_22, %c0_23] : memref<32x1xf32, #tpu.memory_space<vmem>>, vector<32x1xf32>
    %23 = vector.broadcast %22 : vector<32x1xf32> to vector<32x16xf32>
    %24 = arith.addf %21, %23 : vector<32x16xf32>
    %cst_24 = arith.constant 0.000000e+00 : f32
    %25 = vector.broadcast %cst_24 : f32 to vector<32x16xf32>
    %26 = arith.maximumf %24, %25 : vector<32x16xf32>
    %cst_25 = arith.constant dense<0.000000e+00> : vector<32xf32>
    %27 = vector.multi_reduction <add>, %19, %cst_25 [1] : vector<32x16xf32> to vector<32xf32>
    %28 = vector.shape_cast %27 : vector<32xf32> to vector<32x1xf32>
    %cst_26 = arith.constant 1.600000e+01 : f32
    %29 = vector.broadcast %cst_26 : f32 to vector<32x1xf32>
    %30 = arith.divf %28, %29 : vector<32x1xf32>
    %c0_27 = arith.constant 0 : index
    %c0_28 = arith.constant 0 : index
    %31 = vector.load %arg10[%c0_27, %c0_28] : memref<32x32xf32, #tpu.memory_space<vmem>>, vector<32x32xf32>
    %cst_29 = arith.constant dense<0.000000e+00> : vector<32x1xf32>
    %32 = tpu.matmul %31, %30, %cst_29 {dimension_numbers = #tpu.dot_dimension_numbers<[1], [0], [0], [1], [0, 0, 1, 1], [], []>} : vector<32x32xf32>, vector<32x1xf32>, vector<32x1xf32> -> vector<32x1xf32>
    %cst_30 = arith.constant 0.000000e+00 : f32
    %33 = vector.broadcast %cst_30 : f32 to vector<32x1xf32>
    %34 = arith.subf %33, %32 : vector<32x1xf32>
    %35 = math.exp %34 : vector<32x1xf32>
    %cst_31 = arith.constant 1.000000e+00 : f32
    %36 = vector.broadcast %cst_31 : f32 to vector<32x1xf32>
    %37 = arith.addf %36, %35 : vector<32x1xf32>
    %cst_32 = arith.constant 1.000000e+00 : f32
    %38 = vector.broadcast %cst_32 : f32 to vector<32x1xf32>
    %39 = arith.divf %38, %37 : vector<32x1xf32>
    %40 = vector.broadcast %39 : vector<32x1xf32> to vector<32x16xf32>
    %41 = arith.mulf %26, %40 : vector<32x16xf32>
    %c0_33 = arith.constant 0 : index
    %c0_34 = arith.constant 0 : index
    %42 = vector.load %arg11[%c0_33, %c0_34] : memref<33x16xf32, #tpu.memory_space<vmem>>, vector<33x16xf32>
    %cst_35 = arith.constant dense<0.000000e+00> : vector<33x64xf32>
    %43 = tpu.matmul %42, %10, %cst_35 {dimension_numbers = #tpu.dot_dimension_numbers<[1], [0], [0], [1], [0, 0, 1, 1], [], []>} : vector<33x16xf32>, vector<16x64xf32>, vector<33x64xf32> -> vector<33x64xf32>
    %c0_36 = arith.constant 0 : index
    %c0_37 = arith.constant 0 : index
    %44 = vector.load %arg12[%c0_36, %c0_37] : memref<33x1xf32, #tpu.memory_space<vmem>>, vector<33x1xf32>
    %45 = vector.broadcast %44 : vector<33x1xf32> to vector<33x64xf32>
    %46 = arith.addf %43, %45 : vector<33x64xf32>
    %c0_38 = arith.constant 0 : index
    %c0_39 = arith.constant 0 : index
    %47 = vector.load %arg13[%c0_38, %c0_39] : memref<33x32xf32, #tpu.memory_space<vmem>>, vector<33x32xf32>
    %cst_40 = arith.constant dense<0.000000e+00> : vector<33x16xf32>
    %48 = tpu.matmul %47, %41, %cst_40 {dimension_numbers = #tpu.dot_dimension_numbers<[1], [0], [0], [1], [0, 0, 1, 1], [], []>} : vector<33x32xf32>, vector<32x16xf32>, vector<33x16xf32> -> vector<33x16xf32>
    %c0_41 = arith.constant 0 : index
    %c0_42 = arith.constant 0 : index
    %49 = vector.load %arg14[%c0_41, %c0_42] : memref<64x256xf32, #tpu.memory_space<vmem>>, vector<64x256xf32>
    %cst_43 = arith.constant dense<0.000000e+00> : vector<33x256xf32>
    %50 = tpu.matmul %46, %49, %cst_43 {dimension_numbers = #tpu.dot_dimension_numbers<[1], [0], [0], [1], [0, 0, 1, 1], [], []>} : vector<33x64xf32>, vector<64x256xf32>, vector<33x256xf32> -> vector<33x256xf32>
    %c0_44 = arith.constant 0 : index
    %c0_45 = arith.constant 0 : index
    %51 = vector.load %arg15[%c0_44, %c0_45] : memref<16x256xf32, #tpu.memory_space<vmem>>, vector<16x256xf32>
    %cst_46 = arith.constant dense<0.000000e+00> : vector<33x256xf32>
    %52 = tpu.matmul %48, %51, %cst_46 {dimension_numbers = #tpu.dot_dimension_numbers<[1], [0], [0], [1], [0, 0, 1, 1], [], []>} : vector<33x16xf32>, vector<16x256xf32>, vector<33x256xf32> -> vector<33x256xf32>
    %53 = arith.addf %50, %52 : vector<33x256xf32>
    %c0_47 = arith.constant 0 : index
    %c0_48 = arith.constant 0 : index
    %c0_49 = arith.constant 0 : index
    %54 = vector.load %arg16[%c0_47, %c0_48, %c0_49] : memref<1x33x256xf32, #tpu.memory_space<vmem>>, vector<1x33x256xf32>
    %55 = vector.shape_cast %54 : vector<1x33x256xf32> to vector<33x256xf32>
    %56 = vector.shape_cast %53 : vector<33x256xf32> to vector<1x33x256xf32>
    tpu.vector_store %arg16[%c0_47, %c0_48, %c0_49], %56 {strides = array<i32>} : memref<1x33x256xf32, #tpu.memory_space<vmem>>, vector<1x33x256xf32>,
    return
  }
  func.func @transform_0(%arg0: i32) -> (i32, i32, i32) {
    %c0_i32 = arith.constant 0 : i32
    %c0_i32_0 = arith.constant 0 : i32
    %c0_i32_1 = arith.constant 0 : i32
    return %arg0, %c0_i32, %c0_i32_0 : i32, i32, i32
  }
  func.func @transform_1(%arg0: i32) -> (i32, i32) {
    %c0_i32 = arith.constant 0 : i32
    %c0_i32_0 = arith.constant 0 : i32
    %c0_i32_1 = arith.constant 0 : i32
    return %c0_i32, %c0_i32_0 : i32, i32
  }
  func.func @transform_2(%arg0: i32) -> (i32, i32) {
    %c0_i32 = arith.constant 0 : i32
    %c0_i32_0 = arith.constant 0 : i32
    %c0_i32_1 = arith.constant 0 : i32
    return %c0_i32, %c0_i32_0 : i32, i32
  }
  func.func @transform_3(%arg0: i32) -> (i32, i32) {
    %c0_i32 = arith.constant 0 : i32
    %c0_i32_0 = arith.constant 0 : i32
    %c0_i32_1 = arith.constant 0 : i32
    return %c0_i32, %c0_i32_0 : i32, i32
  }
  func.func @transform_4(%arg0: i32) -> (i32, i32) {
    %c0_i32 = arith.constant 0 : i32
    %c0_i32_0 = arith.constant 0 : i32
    %c0_i32_1 = arith.constant 0 : i32
    return %c0_i32, %c0_i32_0 : i32, i32
  }
  func.func @transform_5(%arg0: i32) -> (i32, i32) {
    %c0_i32 = arith.constant 0 : i32
    %c0_i32_0 = arith.constant 0 : i32
    %c0_i32_1 = arith.constant 0 : i32
    return %c0_i32, %c0_i32_0 : i32, i32
  }
  func.func @transform_6(%arg0: i32) -> (i32, i32) {
    %c0_i32 = arith.constant 0 : i32
    %c0_i32_0 = arith.constant 0 : i32
    %c0_i32_1 = arith.constant 0 : i32
    return %c0_i32, %c0_i32_0 : i32, i32
  }
  func.func @transform_7(%arg0: i32) -> (i32, i32) {
    %c0_i32 = arith.constant 0 : i32
    %c0_i32_0 = arith.constant 0 : i32
    %c0_i32_1 = arith.constant 0 : i32
    return %c0_i32, %c0_i32_0 : i32, i32
  }
  func.func @transform_8(%arg0: i32) -> (i32, i32) {
    %c0_i32 = arith.constant 0 : i32
    %c0_i32_0 = arith.constant 0 : i32
    %c0_i32_1 = arith.constant 0 : i32
    return %c0_i32, %c0_i32_0 : i32, i32
  }
  func.func @transform_9(%arg0: i32) -> (i32, i32) {
    %c0_i32 = arith.constant 0 : i32
    %c0_i32_0 = arith.constant 0 : i32
    %c0_i32_1 = arith.constant 0 : i32
    return %c0_i32, %c0_i32_0 : i32, i32
  }
  func.func @transform_10(%arg0: i32) -> (i32, i32) {
    %c0_i32 = arith.constant 0 : i32
    %c0_i32_0 = arith.constant 0 : i32
    %c0_i32_1 = arith.constant 0 : i32
    return %c0_i32, %c0_i32_0 : i32, i32
  }
  func.func @transform_11(%arg0: i32) -> (i32, i32) {
    %c0_i32 = arith.constant 0 : i32
    %c0_i32_0 = arith.constant 0 : i32
    %c0_i32_1 = arith.constant 0 : i32
    return %c0_i32, %c0_i32_0 : i32, i32
  }
  func.func @transform_12(%arg0: i32) -> (i32, i32) {
    %c0_i32 = arith.constant 0 : i32
    %c0_i32_0 = arith.constant 0 : i32
    %c0_i32_1 = arith.constant 0 : i32
    return %c0_i32, %c0_i32_0 : i32, i32
  }
  func.func @transform_13(%arg0: i32) -> (i32, i32) {
    %c0_i32 = arith.constant 0 : i32
    %c0_i32_0 = arith.constant 0 : i32
    %c0_i32_1 = arith.constant 0 : i32
    return %c0_i32, %c0_i32_0 : i32, i32
  }
  func.func @transform_14(%arg0: i32) -> (i32, i32) {
    %c0_i32 = arith.constant 0 : i32
    %c0_i32_0 = arith.constant 0 : i32
    %c0_i32_1 = arith.constant 0 : i32
    return %c0_i32, %c0_i32_0 : i32, i32
  }
  func.func @transform_15(%arg0: i32) -> (i32, i32, i32) {
    %c0_i32 = arith.constant 0 : i32
    %c0_i32_0 = arith.constant 0 : i32
    %c0_i32_1 = arith.constant 0 : i32
    return %arg0, %c0_i32, %c0_i32_0 : i32, i32, i32
  }
}

</mosaic_0001>

<llo_original>
// kernel: lraspp_forward.1
$region0: #{lraspp_forward.1}
  #allocation0 [shape = 'u32[]', space=smem, size = 0x4, offset = 0x4, fixed_abs, tag = 'smem constant byte address 0x4 - core index']
  #allocation1 [shape = 'u32[144,128]{1,0:T(1,128)}', space=vmem, size = 0x12000, scoped, tag = 'internal scratch']
  %s0 = inlined_call_operand.vmem [shape: f32[2,4,256], index: 0, kind: input, shape index: {}]
  %s1 = inlined_call_operand.vmem [shape: f32[256,64], index: 1, kind: input, shape index: {}]
  %s2 = inlined_call_operand.vmem [shape: f32[64,16], index: 2, kind: input, shape index: {}]
  %s3 = inlined_call_operand.vmem [shape: f32[16,4], index: 3, kind: input, shape index: {}]
  %s4 = inlined_call_operand.vmem [shape: f32[16,1], index: 4, kind: input, shape index: {}]
  %s5 = inlined_call_operand.vmem [shape: f32[32,16], index: 5, kind: input, shape index: {}]
  %s6 = inlined_call_operand.vmem [shape: f32[32,1], index: 6, kind: input, shape index: {}]
  %s7 = inlined_call_operand.vmem [shape: f32[32,32], index: 7, kind: input, shape index: {}]
  %s8 = inlined_call_operand.vmem [shape: f32[32,1], index: 8, kind: input, shape index: {}]
  %s9 = inlined_call_operand.vmem [shape: f32[32,32], index: 9, kind: input, shape index: {}]
  %s10 = inlined_call_operand.vmem [shape: f32[33,16], index: 10, kind: input, shape index: {}]
  %s11 = inlined_call_operand.vmem [shape: f32[33,1], index: 11, kind: input, shape index: {}]
  %s12 = inlined_call_operand.vmem [shape: f32[33,32], index: 12, kind: input, shape index: {}]
  %s13 = inlined_call_operand.vmem [shape: f32[64,256], index: 13, kind: input, shape index: {}]
  %s14 = inlined_call_operand.vmem [shape: f32[16,256], index: 14, kind: input, shape index: {}]
  %s15 = inlined_call_operand.vmem [shape: f32[2,33,256], index: 15, kind: output, shape index: {}]
  %s16 = sld [smem:[#allocation0]]
  $region93: #{lraspp_forward.1} parent=0
    _
  %s18 = ssub.s32 1, %s16
  %s19 = scalar_select 0, %s18, %s16
  loop: start=0, step=1, limit=4
  $region2: #{lraspp_forward.1} parent=0 // loop_pre_header
    _
  $region3: #{lraspp_forward.1} parent=0 // loop_header
    %s21 = sphi 0, %s25
    %p22 = scmp.ge.s32.totalorder %s21, 4
    %s31 = sphi 0, %s33
    %s34 = sphi 0, %s31
    %s35 = sphi 0, %s34
    %s51 = sphi 0, %s35
    %s55 = sphi 0, %s55
    %s57 = sphi 0, %s55
    %s58 = sphi 0, %s57
    %s72 = sphi 0, %s58
    %s76 = sphi 0, %s76
    %s78 = sphi 0, %s76
    %s79 = sphi 0, %s78
    %s93 = sphi 0, %s79
    %s97 = sphi 0, %s97
    %s99 = sphi 0, %s97
    %s100 = sphi 0, %s99
    %s114 = sphi 0, %s100
    %s118 = sphi 0, %s118
    %s120 = sphi 0, %s118
    %s121 = sphi 0, %s120
    %s135 = sphi 0, %s121
    %s139 = sphi 0, %s139
    %s141 = sphi 0, %s139
    %s142 = sphi 0, %s141
    %s156 = sphi 0, %s142
    %s160 = sphi 0, %s160
    %s162 = sphi 0, %s160
    %s163 = sphi 0, %s162
    %s177 = sphi 0, %s163
    %s181 = sphi 0, %s181
    %s183 = sphi 0, %s181
    %s184 = sphi 0, %s183
    %s198 = sphi 0, %s184
    %s202 = sphi 0, %s202
    %s204 = sphi 0, %s202
    %s205 = sphi 0, %s204
    %s219 = sphi 0, %s205
    %s223 = sphi 0, %s223
    %s225 = sphi 0, %s223
    %s226 = sphi 0, %s225
    %s240 = sphi 0, %s226
    %s244 = sphi 0, %s244
    %s246 = sphi 0, %s244
    %s247 = sphi 0, %s246
    %s261 = sphi 0, %s247
    %s265 = sphi 0, %s265
    %s267 = sphi 0, %s265
    %s268 = sphi 0, %s267
    %s282 = sphi 0, %s268
    %s286 = sphi 0, %s286
    %s288 = sphi 0, %s286
    %s289 = sphi 0, %s288
    %s303 = sphi 0, %s289
    %s307 = sphi 0, %s307
    %s309 = sphi 0, %s307
    %s310 = sphi 0, %s309
    %s324 = sphi 0, %s310
    %s328 = sphi 0, %s328
    %s330 = sphi 0, %s328
    %s331 = sphi 0, %s330
    %s345 = sphi 0, %s331
    %s351 = sphi 0, %s353
    %s354 = sphi 0, %s351
    %s355 = sphi 0, %s354
    %s371 = sphi 0, %s355
  $region4: #{lraspp_forward.1} parent=0 // loop_header_branch
    %24 = sbr.rel (%p22) target = $region8
  $region5: #{lraspp_forward.1} parent=0 // loop_body
    %s26 = ssub.s32 %s21, 1
    %s27 = ssub.s32 %s21, 2
    %s28 = sadd.s32 %s21, 1
    %s29 = ssub.s32 %s21, %s28
    %p30 = scmp.eq.s32.totalorder %s29, 0
    %s32 = sadd.s32 %s31, 1
    %s33 = scalar_select %p30, %s31, %s32
    %p36 = pneg %p30
    %p37 = scmp.eq.s32.totalorder %s21, 1
    %p38 = por %p36, %p37
    %p39 = scmp.ne.s32.totalorder %s31, %s34
    %p40 = scmp.eq.s32.totalorder %s21, 0
    %p41 = por %p39, %p40
    %p42 = scmp.ne.s32.totalorder %s31, %s34
    %p43 = scmp.eq.s32.totalorder %s26, 1
    %p44 = por %p42, %p43
    %p45 = scmp.ne.s32.totalorder %s34, %s35
    %p46 = scmp.eq.s32.totalorder %s26, 0
    %p47 = por %p45, %p46
    %p48 = scmp.ne.s32.totalorder %s34, %s35
    %p49 = scmp.eq.s32.totalorder %s27, 1
    %p50 = por %p48, %p49
    %p52 = scmp.ne.s32.totalorder %s35, %s51
    %p53 = scmp.eq.s32.totalorder %s27, 0
    %p54 = por %p52, %p53
    %s56 = sadd.s32 %s55, 1
    %p59 = scmp.eq.s32.totalorder %s21, 1
    %p60 = scmp.ne.s32.totalorder %s55, %s57
    %p61 = scmp.eq.s32.totalorder %s21, 0
    %p62 = por %p60, %p61
    %p63 = scmp.ne.s32.totalorder %s55, %s57
    %p64 = scmp.eq.s32.totalorder %s26, 1
    %p65 = por %p63, %p64
    %p66 = scmp.ne.s32.totalorder %s57, %s58
    %p67 = scmp.eq.s32.totalorder %s26, 0
    %p68 = por %p66, %p67
    %p69 = scmp.ne.s32.totalorder %s57, %s58
    %p70 = scmp.eq.s32.totalorder %s27, 1
    %p71 = por %p69, %p70
    %p73 = scmp.ne.s32.totalorder %s58, %s72
    %p74 = scmp.eq.s32.totalorder %s27, 0
    %p75 = por %p73, %p74
    %s77 = sadd.s32 %s76, 1
    %p80 = scmp.eq.s32.totalorder %s21, 1
    %p81 = scmp.ne.s32.totalorder %s76, %s78
    %p82 = scmp.eq.s32.totalorder %s21, 0
    %p83 = por %p81, %p82
    %p84 = scmp.ne.s32.totalorder %s76, %s78
    %p85 = scmp.eq.s32.totalorder %s26, 1
    %p86 = por %p84, %p85
    %p87 = scmp.ne.s32.totalorder %s78, %s79
    %p88 = scmp.eq.s32.totalorder %s26, 0
    %p89 = por %p87, %p88
    %p90 = scmp.ne.s32.totalorder %s78, %s79
    %p91 = scmp.eq.s32.totalorder %s27, 1
    %p92 = por %p90, %p91
    %p94 = scmp.ne.s32.totalorder %s79, %s93
    %p95 = scmp.eq.s32.totalorder %s27, 0
    %p96 = por %p94, %p95
    %s98 = sadd.s32 %s97, 1
    %p101 = scmp.eq.s32.totalorder %s21, 1
    %p102 = scmp.ne.s32.totalorder %s97, %s99
    %p103 = scmp.eq.s32.totalorder %s21, 0
    %p104 = por %p102, %p103
    %p105 = scmp.ne.s32.totalorder %s97, %s99
    %p106 = scmp.eq.s32.totalorder %s26, 1
    %p107 = por %p105, %p106
    %p108 = scmp.ne.s32.totalorder %s99, %s100
    %p109 = scmp.eq.s32.totalorder %s26, 0
    %p110 = por %p108, %p109
    %p111 = scmp.ne.s32.totalorder %s99, %s100
    %p112 = scmp.eq.s32.totalorder %s27, 1
    %p113 = por %p111, %p112
    %p115 = scmp.ne.s32.totalorder %s100, %s114
    %p116 = scmp.eq.s32.totalorder %s27, 0
    %p117 = por %p115, %p116
    %s119 = sadd.s32 %s118, 1
    %p122 = scmp.eq.s32.totalorder %s21, 1
    %p123 = scmp.ne.s32.totalorder %s118, %s120
    %p124 = scmp.eq.s32.totalorder %s21, 0
    %p125 = por %p123, %p124
    %p126 = scmp.ne.s32.totalorder %s118, %s120
    %p127 = scmp.eq.s32.totalorder %s26, 1
    %p128 = por %p126, %p127
    %p129 = scmp.ne.s32.totalorder %s120, %s121
    %p130 = scmp.eq.s32.totalorder %s26, 0
    %p131 = por %p129, %p130
    %p132 = scmp.ne.s32.totalorder %s120, %s121
    %p133 = scmp.eq.s32.totalorder %s27, 1
    %p134 = por %p132, %p133
    %p136 = scmp.ne.s32.totalorder %s121, %s135
    %p137 = scmp.eq.s32.totalorder %s27, 0
    %p138 = por %p136, %p137
    %s140 = sadd.s32 %s139, 1
    %p143 = scmp.eq.s32.totalorder %s21, 1
    %p144 = scmp.ne.s32.totalorder %s139, %s141
    %p145 = scmp.eq.s32.totalorder %s21, 0
    %p146 = por %p144, %p145
    %p147 = scmp.ne.s32.totalorder %s139, %s141
    %p148 = scmp.eq.s32.totalorder %s26, 1
    %p149 = por %p147, %p148
    %p150 = scmp.ne.s32.totalorder %s141, %s142
    %p151 = scmp.eq.s32.totalorder %s26, 0
    %p152 = por %p150, %p151
    %p153 = scmp.ne.s32.totalorder %s141, %s142
    %p154 = scmp.eq.s32.totalorder %s27, 1
    %p155 = por %p153, %p154
    %p157 = scmp.ne.s32.totalorder %s142, %s156
    %p158 = scmp.eq.s32.totalorder %s27, 0
    %p159 = por %p157, %p158
    %s161 = sadd.s32 %s160, 1
    %p164 = scmp.eq.s32.totalorder %s21, 1
    %p165 = scmp.ne.s32.totalorder %s160, %s162
    %p166 = scmp.eq.s32.totalorder %s21, 0
    %p167 = por %p165, %p166
    %p168 = scmp.ne.s32.totalorder %s160, %s162
    %p169 = scmp.eq.s32.totalorder %s26, 1
    %p170 = por %p168, %p169
    %p171 = scmp.ne.s32.totalorder %s162, %s163
    %p172 = scmp.eq.s32.totalorder %s26, 0
    %p173 = por %p171, %p172
    %p174 = scmp.ne.s32.totalorder %s162, %s163
    %p175 = scmp.eq.s32.totalorder %s27, 1
    %p176 = por %p174, %p175
    %p178 = scmp.ne.s32.totalorder %s163, %s177
    %p179 = scmp.eq.s32.totalorder %s27, 0
    %p180 = por %p178, %p179
    %s182 = sadd.s32 %s181, 1
    %p185 = scmp.eq.s32.totalorder %s21, 1
    %p186 = scmp.ne.s32.totalorder %s181, %s183
    %p187 = scmp.eq.s32.totalorder %s21, 0
    %p188 = por %p186, %p187
    %p189 = scmp.ne.s32.totalorder %s181, %s183
    %p190 = scmp.eq.s32.totalorder %s26, 1
    %p191 = por %p189, %p190
    %p192 = scmp.ne.s32.totalorder %s183, %s184
    %p193 = scmp.eq.s32.totalorder %s26, 0
    %p194 = por %p192, %p193
    %p195 = scmp.ne.s32.totalorder %s183, %s184
    %p196 = scmp.eq.s32.totalorder %s27, 1
    %p197 = por %p195, %p196
    %p199 = scmp.ne.s32.totalorder %s184, %s198
    %p200 = scmp.eq.s32.totalorder %s27, 0
    %p201 = por %p199, %p200
    %s203 = sadd.s32 %s202, 1
    %p206 = scmp.eq.s32.totalorder %s21, 1
    %p207 = scmp.ne.s32.totalorder %s202, %s204
    %p208 = scmp.eq.s32.totalorder %s21, 0
    %p209 = por %p207, %p208
    %p210 = scmp.ne.s32.totalorder %s202, %s204
    %p211 = scmp.eq.s32.totalorder %s26, 1
    %p212 = por %p210, %p211
    %p213 = scmp.ne.s32.totalorder %s204, %s205
    %p214 = scmp.eq.s32.totalorder %s26, 0
    %p215 = por %p213, %p214
    %p216 = scmp.ne.s32.totalorder %s204, %s205
    %p217 = scmp.eq.s32.totalorder %s27, 1
    %p218 = por %p216, %p217
    %p220 = scmp.ne.s32.totalorder %s205, %s219
    %p221 = scmp.eq.s32.totalorder %s27, 0
    %p222 = por %p220, %p221
    %s224 = sadd.s32 %s223, 1
    %p227 = scmp.eq.s32.totalorder %s21, 1
    %p228 = scmp.ne.s32.totalorder %s223, %s225
    %p229 = scmp.eq.s32.totalorder %s21, 0
    %p230 = por %p228, %p229
    %p231 = scmp.ne.s32.totalorder %s223, %s225
    %p232 = scmp.eq.s32.totalorder %s26, 1
    %p233 = por %p231, %p232
    %p234 = scmp.ne.s32.totalorder %s225, %s226
    %p235 = scmp.eq.s32.totalorder %s26, 0
    %p236 = por %p234, %p235
    %p237 = scmp.ne.s32.totalorder %s225, %s226
    %p238 = scmp.eq.s32.totalorder %s27, 1
    %p239 = por %p237, %p238
    %p241 = scmp.ne.s32.totalorder %s226, %s240
    %p242 = scmp.eq.s32.totalorder %s27, 0
    %p243 = por %p241, %p242
    %s245 = sadd.s32 %s244, 1
    %p248 = scmp.eq.s32.totalorder %s21, 1
    %p249 = scmp.ne.s32.totalorder %s244, %s246
    %p250 = scmp.eq.s32.totalorder %s21, 0
    %p251 = por %p249, %p250
    %p252 = scmp.ne.s32.totalorder %s244, %s246
    %p253 = scmp.eq.s32.totalorder %s26, 1
    %p254 = por %p252, %p253
    %p255 = scmp.ne.s32.totalorder %s246, %s247
    %p256 = scmp.eq.s32.totalorder %s26, 0
    %p257 = por %p255, %p256
    %p258 = scmp.ne.s32.totalorder %s246, %s247
    %p259 = scmp.eq.s32.totalorder %s27, 1
    %p260 = por %p258, %p259
    %p262 = scmp.ne.s32.totalorder %s247, %s261
    %p263 = scmp.eq.s32.totalorder %s27, 0
    %p264 = por %p262, %p263
    %s266 = sadd.s32 %s265, 1
    %p269 = scmp.eq.s32.totalorder %s21, 1
    %p270 = scmp.ne.s32.totalorder %s265, %s267
    %p271 = scmp.eq.s32.totalorder %s21, 0
    %p272 = por %p270, %p271
    %p273 = scmp.ne.s32.totalorder %s265, %s267
    %p274 = scmp.eq.s32.totalorder %s26, 1
    %p275 = por %p273, %p274
    %p276 = scmp.ne.s32.totalorder %s267, %s268
    %p277 = scmp.eq.s32.totalorder %s26, 0
    %p278 = por %p276, %p277
    %p279 = scmp.ne.s32.totalorder %s267, %s268
    %p280 = scmp.eq.s32.totalorder %s27, 1
    %p281 = por %p279, %p280
    %p283 = scmp.ne.s32.totalorder %s268, %s282
    %p284 = scmp.eq.s32.totalorder %s27, 0
    %p285 = por %p283, %p284
    %s287 = sadd.s32 %s286, 1
    %p290 = scmp.eq.s32.totalorder %s21, 1
    %p291 = scmp.ne.s32.totalorder %s286, %s288
    %p292 = scmp.eq.s32.totalorder %s21, 0
    %p293 = por %p291, %p292
    %p294 = scmp.ne.s32.totalorder %s286, %s288
    %p295 = scmp.eq.s32.totalorder %s26, 1
    %p296 = por %p294, %p295
    %p297 = scmp.ne.s32.totalorder %s288, %s289
    %p298 = scmp.eq.s32.totalorder %s26, 0
    %p299 = por %p297, %p298
    %p300 = scmp.ne.s32.totalorder %s288, %s289
    %p301 = scmp.eq.s32.totalorder %s27, 1
    %p302 = por %p300, %p301
    %p304 = scmp.ne.s32.totalorder %s289, %s303
    %p305 = scmp.eq.s32.totalorder %s27, 0
    %p306 = por %p304, %p305
    %s308 = sadd.s32 %s307, 1
    %p311 = scmp.eq.s32.totalorder %s21, 1
    %p312 = scmp.ne.s32.totalorder %s307, %s309
    %p313 = scmp.eq.s32.totalorder %s21, 0
    %p314 = por %p312, %p313
    %p315 = scmp.ne.s32.totalorder %s307, %s309
    %p316 = scmp.eq.s32.totalorder %s26, 1
    %p317 = por %p315, %p316
    %p318 = scmp.ne.s32.totalorder %s309, %s310
    %p319 = scmp.eq.s32.totalorder %s26, 0
    %p320 = por %p318, %p319
    %p321 = scmp.ne.s32.totalorder %s309, %s310
    %p322 = scmp.eq.s32.totalorder %s27, 1
    %p323 = por %p321, %p322
    %p325 = scmp.ne.s32.totalorder %s310, %s324
    %p326 = scmp.eq.s32.totalorder %s27, 0
    %p327 = por %p325, %p326
    %s329 = sadd.s32 %s328, 1
    %p332 = scmp.eq.s32.totalorder %s21, 1
    %p333 = scmp.ne.s32.totalorder %s328, %s330
    %p334 = scmp.eq.s32.totalorder %s21, 0
    %p335 = por %p333, %p334
    %p336 = scmp.ne.s32.totalorder %s328, %s330
    %p337 = scmp.eq.s32.totalorder %s26, 1
    %p338 = por %p336, %p337
    %p339 = scmp.ne.s32.totalorder %s330, %s331
    %p340 = scmp.eq.s32.totalorder %s26, 0
    %p341 = por %p339, %p340
    %p342 = scmp.ne.s32.totalorder %s330, %s331
    %p343 = scmp.eq.s32.totalorder %s27, 1
    %p344 = por %p342, %p343
    %p346 = scmp.ne.s32.totalorder %s331, %s345
    %p347 = scmp.eq.s32.totalorder %s27, 0
    %p348 = por %p346, %p347
    %s349 = ssub.s32 %s21, %s28
    %p350 = scmp.eq.s32.totalorder %s349, 0
    %s352 = sadd.s32 %s351, 1
    %s353 = scalar_select %p350, %s351, %s352
    %p356 = pneg %p350
    %p357 = scmp.eq.s32.totalorder %s21, 1
    %p358 = por %p356, %p357
    %p359 = scmp.ne.s32.totalorder %s351, %s354
    %p360 = scmp.eq.s32.totalorder %s21, 0
    %p361 = por %p359, %p360
    %p362 = scmp.ne.s32.totalorder %s351, %s354
    %p363 = scmp.eq.s32.totalorder %s26, 1
    %p364 = por %p362, %p363
    %p365 = scmp.ne.s32.totalorder %s354, %s355
    %p366 = scmp.eq.s32.totalorder %s26, 0
    %p367 = por %p365, %p366
    %p368 = scmp.ne.s32.totalorder %s354, %s355
    %p369 = scmp.eq.s32.totalorder %s27, 1
    %p370 = por %p368, %p369
    %p372 = scmp.ne.s32.totalorder %s355, %s371
    %p373 = scmp.eq.s32.totalorder %s27, 0
    %p374 = por %p372, %p373
    %p375 = scmp.le.s32.totalorder 1, %s21
    %p376 = scmp.lt.s32.totalorder %s21, 3
    %p377 = pnand %p375, %p376
    %p378 = pneg %p377
    // Predicated region
    $region9: #{lraspp_forward.1} parent=5 // pred_check
      _
    $region10: #{lraspp_forward.1} parent=5 // pred_check_branch
      %380 = sbr.rel (%p377) target = $region12
    $region11: #{lraspp_forward.1} parent=5 // pred_region
      %s381 = ssub.s32 %s21, 1
      // Predicated region
      $region13: #{lraspp_forward.1} parent=11 // pred_check
        %p382 = pneg %p68
      $region14: #{lraspp_forward.1} parent=11 // pred_check_branch
        %384 = sbr.rel (%p382) target = $region16
      $region15: #{lraspp_forward.1} parent=11 // pred_region
        _
      $region16: #{lraspp_forward.1} parent=11 // pred_fallthru
        _
      // Predicated region
      $region17: #{lraspp_forward.1} parent=11 // pred_check
        %p385 = pneg %p89
      $region18: #{lraspp_forward.1} parent=11 // pred_check_branch
        %387 = sbr.rel (%p385) target = $region20
      $region19: #{lraspp_forward.1} parent=11 // pred_region
        _
      $region20: #{lraspp_forward.1} parent=11 // pred_fallthru
        _
      // Predicated region
      $region21: #{lraspp_forward.1} parent=11 // pred_check
        %p388 = pneg %p110
      $region22: #{lraspp_forward.1} parent=11 // pred_check_branch
        %390 = sbr.rel (%p388) target = $region24
      $region23: #{lraspp_forward.1} parent=11 // pred_region
        _
      $region24: #{lraspp_forward.1} parent=11 // pred_fallthru
        _
      // Predicated region
      $region25: #{lraspp_forward.1} parent=11 // pred_check
        %p391 = pneg %p131
      $region26: #{lraspp_forward.1} parent=11 // pred_check_branch
        %393 = sbr.rel (%p391) target = $region28
      $region27: #{lraspp_forward.1} parent=11 // pred_region
        _
      $region28: #{lraspp_forward.1} parent=11 // pred_fallthru
        _
      // Predicated region
      $region29: #{lraspp_forward.1} parent=11 // pred_check
        %p394 = pneg %p152
      $region30: #{lraspp_forward.1} parent=11 // pred_check_branch
        %396 = sbr.rel (%p394) target = $region32
      $region31: #{lraspp_forward.1} parent=11 // pred_region
        _
      $region32: #{lraspp_forward.1} parent=11 // pred_fallthru
        _
      // Predicated region
      $region33: #{lraspp_forward.1} parent=11 // pred_check
        %p397 = pneg %p173
      $region34: #{lraspp_forward.1} parent=11 // pred_check_branch
        %399 = sbr.rel (%p397) target = $region36
      $region35: #{lraspp_forward.1} parent=11 // pred_region
        _
      $region36: #{lraspp_forward.1} parent=11 // pred_fallthru
        _
      // Predicated region
      $region37: #{lraspp_forward.1} parent=11 // pred_check
        %p400 = pneg %p194
      $region38: #{lraspp_forward.1} parent=11 // pred_check_branch
        %402 = sbr.rel (%p400) target = $region40
      $region39: #{lraspp_forward.1} parent=11 // pred_region
        _
      $region40: #{lraspp_forward.1} parent=11 // pred_fallthru
        _
      // Predicated region
      $region41: #{lraspp_forward.1} parent=11 // pred_check
        %p403 = pneg %p215
      $region42: #{lraspp_forward.1} parent=11 // pred_check_branch
        %405 = sbr.rel (%p403) target = $region44
      $region43: #{lraspp_forward.1} parent=11 // pred_region
        _
      $region44: #{lraspp_forward.1} parent=11 // pred_fallthru
        _
      // Predicated region
      $region45: #{lraspp_forward.1} parent=11 // pred_check
        %p406 = pneg %p236
      $region46: #{lraspp_forward.1} parent=11 // pred_check_branch
        %408 = sbr.rel (%p406) target = $region48
      $region47: #{lraspp_forward.1} parent=11 // pred_region
        _
      $region48: #{lraspp_forward.1} parent=11 // pred_fallthru
        _
      // Predicated region
      $region49: #{lraspp_forward.1} parent=11 // pred_check
        %p409 = pneg %p257
      $region50: #{lraspp_forward.1} parent=11 // pred_check_branch
        %411 = sbr.rel (%p409) target = $region52
      $region51: #{lraspp_forward.1} parent=11 // pred_region
        _
      $region52: #{lraspp_forward.1} parent=11 // pred_fallthru
        _
      // Predicated region
      $region53: #{lraspp_forward.1} parent=11 // pred_check
        %p412 = pneg %p278
      $region54: #{lraspp_forward.1} parent=11 // pred_check_branch
        %414 = sbr.rel (%p412) target = $region56
      $region55: #{lraspp_forward.1} parent=11 // pred_region
        _
      $region56: #{lraspp_forward.1} parent=11 // pred_fallthru
        _
      // Predicated region
      $region57: #{lraspp_forward.1} parent=11 // pred_check
        %p415 = pneg %p299
      $region58: #{lraspp_forward.1} parent=11 // pred_check_branch
        %417 = sbr.rel (%p415) target = $region60
      $region59: #{lraspp_forward.1} parent=11 // pred_region
        _
      $region60: #{lraspp_forward.1} parent=11 // pred_fallthru
        _
      // Predicated region
      $region61: #{lraspp_forward.1} parent=11 // pred_check
        %p418 = pneg %p320
      $region62: #{lraspp_forward.1} parent=11 // pred_check_branch
        %420 = sbr.rel (%p418) target = $region64
      $region63: #{lraspp_forward.1} parent=11 // pred_region
        _
      $region64: #{lraspp_forward.1} parent=11 // pred_fallthru
        _
      // Predicated region
      $region65: #{lraspp_forward.1} parent=11 // pred_check
        %p421 = pneg %p341
      $region66: #{lraspp_forward.1} parent=11 // pred_check_branch
        %423 = sbr.rel (%p421) target = $region68
      $region67: #{lraspp_forward.1} parent=11 // pred_region
        _
      $region68: #{lraspp_forward.1} parent=11 // pred_fallthru
        _
    $region12: #{lraspp_forward.1} parent=5 // pred_fallthru
      _
    %p424 = scmp.lt.s32.totalorder %s21, 2
    // Predicated region
    $region69: #{lraspp_forward.1} parent=5 // pred_check
      %p425 = pneg %p424
    $region70: #{lraspp_forward.1} parent=5 // pred_check_branch
      %427 = sbr.rel (%p425) target = $region72
    $region71: #{lraspp_forward.1} parent=5 // pred_region
      // Predicated region
      $region73: #{lraspp_forward.1} parent=71 // pred_check
        %p428 = pneg %p41
      $region74: #{lraspp_forward.1} parent=71 // pred_check_branch
        %430 = sbr.rel (%p428) target = $region76
      $region75: #{lraspp_forward.1} parent=71 // pred_region
        %p431 = scmp.lt.s32.totalorder %s21, 1
        %s432 = scalar_select %p431, %s21, 1
        %s433 = smul.addr %s432, 2
        %s434 = smul.addr %s433, 4
        %s435 = scalar_lea.vmem %s0, %s434
      $region76: #{lraspp_forward.1} parent=71 // pred_fallthru
        _
    $region72: #{lraspp_forward.1} parent=5 // pred_fallthru
      _
    %p436 = scmp.le.s32.totalorder 1, %s21
    %p437 = scmp.lt.s32.totalorder %s21, 3
    %p438 = pnand %p436, %p437
    %p439 = pneg %p438
    // Predicated region
    $region77: #{lraspp_forward.1} parent=5 // pred_check
      _
    $region78: #{lraspp_forward.1} parent=5 // pred_check_branch
      %441 = sbr.rel (%p438) target = $region80
    $region79: #{lraspp_forward.1} parent=5 // pred_region
      %s442 = ssub.s32 %s21, 1
      %p443 = scmp.lt.s32.totalorder %s26, 1
      %s444 = scalar_select %p443, %s26, 1
      %s445 = smul.addr %s444, 2
      %s446 = smul.addr %s445, 4
      %s447 = scalar_lea.vmem %s0, %s446
      %p448 = pneg %p47
      %p449 = pneg %p44
      %p450 = pneg %p68
      %p451 = pneg %p65
      %p452 = pneg %p89
      %p453 = pneg %p86
      %p454 = pneg %p110
      %p455 = pneg %p107
      %p456 = pneg %p131
      %p457 = pneg %p128
      %p458 = pneg %p152
      %p459 = pneg %p149
      %p460 = pneg %p173
      %p461 = pneg %p170
      %p462 = pneg %p194
      %p463 = pneg %p191
      %p464 = pneg %p215
      %p465 = pneg %p212
      %p466 = pneg %p236
      %p467 = pneg %p233
      %p468 = pneg %p257
      %p469 = pneg %p254
      %p470 = pneg %p278
      %p471 = pneg %p275
      %p472 = pneg %p299
      %p473 = pneg %p296
      %p474 = pneg %p320
      %p475 = pneg %p317
      %p476 = pneg %p341
      %p477 = pneg %p338
      %p478 = pneg %p367
      %p479 = pneg %p364
      %p480 = scmp.lt.s32.totalorder %s26, 1
      %s481 = scalar_select %p480, %s26, 1
      %s482 = smul.addr %s481, 10
      %s483 = smul.addr %s482, 8
      %s484 = scalar_lea.vmem %s15, %s483
      %p485 = scmp.lt.s32.totalorder %s26, 1
      %s486 = scalar_select %p485, %s26, 1
      %s487 = smul.addr %s486, 2
      %s488 = smul.addr %s487, 4
      %s489 = scalar_lea.vmem %s0, %s488
      %p490 = scmp.lt.s32.totalorder %s26, 1
      %s491 = scalar_select %p490, %s26, 1
      %s492 = smul.addr %s491, 10
      %s493 = smul.addr %s492, 8
      %s494 = scalar_lea.vmem %s15, %s493
      %v495 = vld [vmem:[%s489] sm:$0xff]
      %v496 = vld [vmem:[%s1] sm:$0xff]
      %v497 = vld [vmem:[%s1 + $0x8] sm:$0xff]
      %v498 = vld [vmem:[%s1 + $0x10] sm:$0xff]
      %v499 = vld [vmem:[%s1 + $0x18] sm:$0xff]
      %v500 = vld [vmem:[%s1 + $0x20] sm:$0xff]
      %v501 = vld [vmem:[%s1 + $0x28] sm:$0xff]
      %v502 = vld [vmem:[%s1 + $0x30] sm:$0xff]
      %v503 = vld [vmem:[%s1 + $0x38] sm:$0xff]
      %v504 = vld [vmem:[%s1 + $0x40] sm:$0xff]
      %v505 = vld [vmem:[%s1 + $0x48] sm:$0xff]
      %v506 = vld [vmem:[%s1 + $0x50] sm:$0xff]
      %v507 = vld [vmem:[%s1 + $0x58] sm:$0xff]
      %v508 = vld [vmem:[%s1 + $0x60] sm:$0xff]
      %v509 = vld [vmem:[%s1 + $0x68] sm:$0xff]
      %v510 = vld [vmem:[%s1 + $0x70] sm:$0xff]
      %v511 = vld [vmem:[%s1 + $0x78] sm:$0xff]
      %v512 = vld [vmem:[%s1 + $0x80] sm:$0xff]
      %v513 = vld [vmem:[%s1 + $0x88] sm:$0xff]
      %v514 = vld [vmem:[%s1 + $0x90] sm:$0xff]
      %v515 = vld [vmem:[%s1 + $0x98] sm:$0xff]
      %v516 = vld [vmem:[%s1 + $0xa0] sm:$0xff]
      %v517 = vld [vmem:[%s1 + $0xa8] sm:$0xff]
      %v518 = vld [vmem:[%s1 + $0xb0] sm:$0xff]
      %v519 = vld [vmem:[%s1 + $0xb8] sm:$0xff]
      %v520 = vld [vmem:[%s1 + $0xc0] sm:$0xff]
      %v521 = vld [vmem:[%s1 + $0xc8] sm:$0xff]
      %v522 = vld [vmem:[%s1 + $0xd0] sm:$0xff]
      %v523 = vld [vmem:[%s1 + $0xd8] sm:$0xff]
      %v524 = vld [vmem:[%s1 + $0xe0] sm:$0xff]
      %v525 = vld [vmem:[%s1 + $0xe8] sm:$0xff]
      %v526 = vld [vmem:[%s1 + $0xf0] sm:$0xff]
      %v527 = vld [vmem:[%s1 + $0xf8] sm:$0xff]
      %v529 = vcombine.high %v495, %v495
      %531 = vmatprep.subr.mxu0 0.0
      %532 = vmatpush1.msra.mxu0 %v496
      %533 = vmatprep.subr.mxu0 0.0
      %534 = vmatpush1.msra.mxu0 %v497
      %535 = vmatprep.subr.mxu0 0.0
      %536 = vmatpush1.msra.mxu0 %v498
      %537 = vmatprep.subr.mxu0 0.0
      %538 = vmatpush1.msra.mxu0 %v499
      %539 = vmatprep.subr.mxu0 0.0
      %540 = vmatpush1.msra.mxu0 %v500
      %541 = vmatprep.subr.mxu0 0.0
      %542 = vmatpush1.msra.mxu0 %v501
      %543 = vmatprep.subr.mxu0 0.0
      %544 = vmatpush1.msra.mxu0 %v502
      %545 = vmatprep.subr.mxu0 0.0
      %546 = vmatpush1.msra.mxu0 %v503
      %547 = vmatprep.subr.mxu0 0.0
      %548 = vmatpush1.msra.mxu0 %v504
      %549 = vmatprep.subr.mxu0 0.0
      %550 = vmatpush1.msra.mxu0 %v505
      %551 = vmatprep.subr.mxu0 0.0
      %552 = vmatpush1.msra.mxu0 %v506
      %553 = vmatprep.subr.mxu0 0.0
      %554 = vmatpush1.msra.mxu0 %v507
      %555 = vmatprep.subr.mxu0 0.0
      %556 = vmatpush1.msra.mxu0 %v508
      %557 = vmatprep.subr.mxu0 0.0
      %558 = vmatpush1.msra.mxu0 %v509
      %559 = vmatprep.subr.mxu0 0.0
      %560 = vmatpush1.msra.mxu0 %v510
      %561 = vmatprep.subr.mxu0 0.0
      %562 = vmatpush1.msra.mxu0 %v511
      %563 = vmatprep.subr.mxu0 0.0
      %564 = vmatpush1.msra.mxu0 %v512
      %565 = vmatprep.subr.mxu0 0.0
      %566 = vmatpush1.msra.mxu0 %v513
      %567 = vmatprep.subr.mxu0 0.0
      %568 = vmatpush1.msra.mxu0 %v514
      %569 = vmatprep.subr.mxu0 0.0
      %570 = vmatpush1.msra.mxu0 %v515
      %571 = vmatprep.subr.mxu0 0.0
      %572 = vmatpush1.msra.mxu0 %v516
      %573 = vmatprep.subr.mxu0 0.0
      %574 = vmatpush1.msra.mxu0 %v517
      %575 = vmatprep.subr.mxu0 0.0
      %576 = vmatpush1.msra.mxu0 %v518
      %577 = vmatprep.subr.mxu0 0.0
      %578 = vmatpush1.msra.mxu0 %v519
      %579 = vmatprep.subr.mxu0 0.0
      %580 = vmatpush1.msra.mxu0 %v520
      %581 = vmatprep.subr.mxu0 0.0
      %582 = vmatpush1.msra.mxu0 %v521
      %583 = vmatprep.subr.mxu0 0.0
      %584 = vmatpush1.msra.mxu0 %v522
      %585 = vmatprep.subr.mxu0 0.0
      %586 = vmatpush1.msra.mxu0 %v523
      %587 = vmatprep.subr.mxu0 0.0
      %588 = vmatpush1.msra.mxu0 %v524
      %589 = vmatprep.subr.mxu0 0.0
      %590 = vmatpush1.msra.mxu0 %v525
      %591 = vmatprep.subr.mxu0 0.0
      %592 = vmatpush1.msra.mxu0 %v526
      %593 = vmatprep.subr.mxu0 0.0
      %594 = vmatpush1.msra.mxu0 %v527
      %595 = vmatprep.mubr.f32.mxu0 %v529
      %596 = vmatmul.mubr.f32.gmra.mrb[0].mxu0 %v495
      %v597 = vpop.f32.mrb[0].mxu0
      %v598 = vadd.f32 0.0, %v597
      %v599 = vpop.f32.mrb[0].mxu0
      %600 = vdwg.mxu0
      %v601 = vld [vmem:[%s3] sm:$0xff]
      %v602 = vld [vmem:[%s3 + $0x8] sm:$0xff]
      %v603 = vld [vmem:[%s4] sm:$0xff]
      %v604 = vld [vmem:[%s4 + $0x8] sm:$0xff]
      %606 = vset.pattern.permute.xlu0 0
      %607 = vperm.xlu0 %606, %v603
      %v608 = vpop.permute.xlu0 %607
      %611 = vset.pattern.permute.xlu0 0
      %612 = vperm.xlu0 %611, %v604
      %v613 = vpop.permute.xlu0 %612
      %vm615 = vcmask 31744
      %v617 = vsel %vm615, %v601, 0
      %v620 = vsel %vm615, %v602, 0
      %vm622 = vcmask 1043456
      %v624 = vsel %vm622, %v598, 0
      %626 = vmatprep.subr.mxu0 0.0
      %627 = vmatpush1.msra.mxu0 %v624
      %628 = vmatprep.subr.mxu0 0.0
      %629 = vmatpush1.msra.mxu0 0.0
      %630 = vmatprep.subr.mxu0 0.0
      %631 = vmatpush1.msra.mxu0 0.0
      %632 = vmatprep.subr.mxu0 0.0
      %633 = vmatpush1.msra.mxu0 0.0
      %634 = vmatprep.subr.mxu0 0.0
      %635 = vmatpush1.msra.mxu0 0.0
      %636 = vmatprep.subr.mxu0 0.0
      %637 = vmatpush1.msra.mxu0 0.0
      %638 = vmatprep.subr.mxu0 0.0
      %639 = vmatpush1.msra.mxu0 0.0
      %640 = vmatprep.subr.mxu0 0.0
      %641 = vmatpush1.msra.mxu0 0.0
      %642 = vmatprep.subr.mxu0 0.0
      %643 = vmatpush1.msra.mxu0 0.0
      %644 = vmatprep.subr.mxu0 0.0
      %645 = vmatpush1.msra.mxu0 0.0
      %646 = vmatprep.subr.mxu0 0.0
      %647 = vmatpush1.msra.mxu0 0.0
      %648 = vmatprep.subr.mxu0 0.0
      %649 = vmatpush1.msra.mxu0 0.0
      %650 = vmatprep.subr.mxu0 0.0
      %651 = vmatpush1.msra.mxu0 0.0
      %652 = vmatprep.subr.mxu0 0.0
      %653 = vmatpush1.msra.mxu0 0.0
      %654 = vmatprep.subr.mxu0 0.0
      %655 = vmatpush1.msra.mxu0 0.0
      %656 = vmatprep.subr.mxu0 0.0
      %657 = vmatpush1.msra.mxu0 0.0
      %658 = vmatprep.subr.mxu0 0.0
      %659 = vmatpush1.msra.mxu0 0.0
      %660 = vmatprep.subr.mxu0 0.0
      %661 = vmatpush1.msra.mxu0 0.0
      %662 = vmatprep.subr.mxu0 0.0
      %663 = vmatpush1.msra.mxu0 0.0
      %664 = vmatprep.subr.mxu0 0.0
      %665 = vmatpush1.msra.mxu0 0.0
      %666 = vmatprep.subr.mxu0 0.0
      %667 = vmatpush1.msra.mxu0 0.0
      %668 = vmatprep.subr.mxu0 0.0
      %669 = vmatpush1.msra.mxu0 0.0
      %670 = vmatprep.subr.mxu0 0.0
      %671 = vmatpush1.msra.mxu0 0.0
      %672 = vmatprep.subr.mxu0 0.0
      %673 = vmatpush1.msra.mxu0 0.0
      %674 = vmatprep.subr.mxu0 0.0
      %675 = vmatpush1.msra.mxu0 0.0
      %676 = vmatprep.subr.mxu0 0.0
      %677 = vmatpush1.msra.mxu0 0.0
      %678 = vmatprep.subr.mxu0 0.0
      %679 = vmatpush1.msra.mxu0 0.0
      %680 = vmatprep.subr.mxu0 0.0
      %681 = vmatpush1.msra.mxu0 0.0
      %682 = vmatprep.subr.mxu0 0.0
      %683 = vmatpush1.msra.mxu0 0.0
      %684 = vmatprep.subr.mxu0 0.0
      %685 = vmatpush1.msra.mxu0 0.0
      %686 = vmatprep.subr.mxu0 0.0
      %687 = vmatpush1.msra.mxu0 0.0
      %688 = vmatprep.subr.mxu0 0.0
      %689 = vmatpush1.msra.mxu0 0.0
      %690 = vmatprep.mubr.f32.mxu0 0.0
      %691 = vmatmul.mubr.f32.gmra.mrb[0].mxu0 %v617
      %v692 = vpop.f32.mrb[0].mxu0
      %v693 = vadd.f32 %v608, %v692
      %v694 = vpop.f32.mrb[0].mxu0
      %695 = vmatprep.mubr.f32.mxu0 0.0
      %696 = vmatmul.mubr.f32.gmra.mrb[0].mxu0 %v620
      %v697 = vpop.f32.mrb[0].mxu0
      %v698 = vadd.f32 %v613, %v697
      %v699 = vpop.f32.mrb[0].mxu0
      %700 = vdwg.mxu0
      %v701 = vmax.f32 %v693, 0.0
      %v702 = vmax.f32 %v698, 0.0
      %v703 = vld [vmem:[%s2] sm:$0xff]
      %v704 = vld [vmem:[%s2 + $0x8] sm:$0xff]
      %v705 = vld [vmem:[%s2 + $0x10] sm:$0xff]
      %v706 = vld [vmem:[%s2 + $0x18] sm:$0xff]
      %v707 = vld [vmem:[%s2 + $0x20] sm:$0xff]
      %v708 = vld [vmem:[%s2 + $0x28] sm:$0xff]
      %v709 = vld [vmem:[%s2 + $0x30] sm:$0xff]
      %v710 = vld [vmem:[%s2 + $0x38] sm:$0xff]
      %vm711 = vcmask 523264
      %v713 = vsel %vm711, %v701, 0
      %v716 = vsel %vm711, %v702, 0
      %718 = vmatprep.subr.mxu0 0.0
      %719 = vmatpush1.msra.mxu0 %v703
      %720 = vmatprep.subr.mxu0 0.0
      %721 = vmatpush1.msra.mxu0 %v704
      %722 = vmatprep.subr.mxu0 0.0
      %723 = vmatpush1.msra.mxu0 %v705
      %724 = vmatprep.subr.mxu0 0.0
      %725 = vmatpush1.msra.mxu0 %v706
      %726 = vmatprep.subr.mxu0 0.0
      %727 = vmatpush1.msra.mxu0 %v707
      %728 = vmatprep.subr.mxu0 0.0
      %729 = vmatpush1.msra.mxu0 %v708
      %730 = vmatprep.subr.mxu0 0.0
      %731 = vmatpush1.msra.mxu0 %v709
      %732 = vmatprep.subr.mxu0 0.0
      %733 = vmatpush1.msra.mxu0 %v710
      %734 = vmatprep.subr.mxu0 0.0
      %735 = vmatpush1.msra.mxu0 0.0
      %736 = vmatprep.subr.mxu0 0.0
      %737 = vmatpush1.msra.mxu0 0.0
      %738 = vmatprep.subr.mxu0 0.0
      %739 = vmatpush1.msra.mxu0 0.0
      %740 = vmatprep.subr.mxu0 0.0
      %741 = vmatpush1.msra.mxu0 0.0
      %742 = vmatprep.subr.mxu0 0.0
      %743 = vmatpush1.msra.mxu0 0.0
      %744 = vmatprep.subr.mxu0 0.0
      %745 = vmatpush1.msra.mxu0 0.0
      %746 = vmatprep.subr.mxu0 0.0
      %747 = vmatpush1.msra.mxu0 0.0
      %748 = vmatprep.subr.mxu0 0.0
      %749 = vmatpush1.msra.mxu0 0.0
      %750 = vmatprep.subr.mxu0 0.0
      %751 = vmatpush1.msra.mxu0 0.0
      %752 = vmatprep.subr.mxu0 0.0
      %753 = vmatpush1.msra.mxu0 0.0
      %754 = vmatprep.subr.mxu0 0.0
      %755 = vmatpush1.msra.mxu0 0.0
      %756 = vmatprep.subr.mxu0 0.0
      %757 = vmatpush1.msra.mxu0 0.0
      %758 = vmatprep.subr.mxu0 0.0
      %759 = vmatpush1.msra.mxu0 0.0
      %760 = vmatprep.subr.mxu0 0.0
      %761 = vmatpush1.msra.mxu0 0.0
      %762 = vmatprep.subr.mxu0 0.0
      %763 = vmatpush1.msra.mxu0 0.0
      %764 = vmatprep.subr.mxu0 0.0
      %765 = vmatpush1.msra.mxu0 0.0
      %766 = vmatprep.subr.mxu0 0.0
      %767 = vmatpush1.msra.mxu0 0.0
      %768 = vmatprep.subr.mxu0 0.0
      %769 = vmatpush1.msra.mxu0 0.0
      %770 = vmatprep.subr.mxu0 0.0
      %771 = vmatpush1.msra.mxu0 0.0
      %772 = vmatprep.subr.mxu0 0.0
      %773 = vmatpush1.msra.mxu0 0.0
      %774 = vmatprep.subr.mxu0 0.0
      %775 = vmatpush1.msra.mxu0 0.0
      %776 = vmatprep.subr.mxu0 0.0
      %777 = vmatpush1.msra.mxu0 0.0
      %778 = vmatprep.subr.mxu0 0.0
      %779 = vmatpush1.msra.mxu0 0.0
      %780 = vmatprep.subr.mxu0 0.0
      %781 = vmatpush1.msra.mxu0 0.0
      %782 = vmatprep.mubr.f32.mxu0 0.0
      %783 = vmatmul.mubr.f32.gmra.mrb[0].mxu0 %v713
      %v784 = vpop.f32.mrb[0].mxu0
      %v785 = vadd.f32 0.0, %v784
      %v786 = vpop.f32.mrb[0].mxu0
      %787 = vmatprep.mubr.f32.mxu0 0.0
      %788 = vmatmul.mubr.f32.gmra.mrb[0].mxu0 %v716
      %v789 = vpop.f32.mrb[0].mxu0
      %v790 = vadd.f32 0.0, %v789
      %v791 = vpop.f32.mrb[0].mxu0
      %792 = vdwg.mxu0
      %v793 = vld [vmem:[%s5] sm:$0xff]
      %v794 = vld [vmem:[%s5 + $0x8] sm:$0xff]
      %v795 = vld [vmem:[%s5 + $0x10] sm:$0xff]
      %v796 = vld [vmem:[%s5 + $0x18] sm:$0xff]
      %v797 = vld [vmem:[%s6] sm:$0xff]
      %v798 = vld [vmem:[%s6 + $0x8] sm:$0xff]
      %v799 = vld [vmem:[%s6 + $0x10] sm:$0xff]
      %v800 = vld [vmem:[%s6 + $0x18] sm:$0xff]
      %802 = vset.pattern.permute.xlu0 0
      %803 = vperm.xlu0 %802, %v797
      %v804 = vpop.permute.xlu0 %803
      %807 = vset.pattern.permute.xlu0 0
      %808 = vperm.xlu0 %807, %v798
      %v809 = vpop.permute.xlu0 %808
      %812 = vset.pattern.permute.xlu0 0
      %813 = vperm.xlu0 %812, %v799
      %v814 = vpop.permute.xlu0 %813
      %817 = vset.pattern.permute.xlu0 0
      %818 = vperm.xlu0 %817, %v800
      %v819 = vpop.permute.xlu0 %818
      %vm821 = vcmask 130048
      %v823 = vsel %vm821, %v793, 0
      %v826 = vsel %vm821, %v794, 0
      %v829 = vsel %vm821, %v795, 0
      %v832 = vsel %vm821, %v796, 0
      %834 = vmatprep.subr.mxu0 0.0
      %835 = vmatpush1.msra.mxu0 %v785
      %836 = vmatprep.subr.mxu0 0.0
      %837 = vmatpush1.msra.mxu0 %v790
      %838 = vmatprep.subr.mxu0 0.0
      %839 = vmatpush1.msra.mxu0 0.0
      %840 = vmatprep.subr.mxu0 0.0
      %841 = vmatpush1.msra.mxu0 0.0
      %842 = vmatprep.subr.mxu0 0.0
      %843 = vmatpush1.msra.mxu0 0.0
      %844 = vmatprep.subr.mxu0 0.0
      %845 = vmatpush1.msra.mxu0 0.0
      %846 = vmatprep.subr.mxu0 0.0
      %847 = vmatpush1.msra.mxu0 0.0
      %848 = vmatprep.subr.mxu0 0.0
      %849 = vmatpush1.msra.mxu0 0.0
      %850 = vmatprep.subr.mxu0 0.0
      %851 = vmatpush1.msra.mxu0 0.0
      %852 = vmatprep.subr.mxu0 0.0
      %853 = vmatpush1.msra.mxu0 0.0
      %854 = vmatprep.subr.mxu0 0.0
      %855 = vmatpush1.msra.mxu0 0.0
      %856 = vmatprep.subr.mxu0 0.0
      %857 = vmatpush1.msra.mxu0 0.0
      %858 = vmatprep.subr.mxu0 0.0
      %859 = vmatpush1.msra.mxu0 0.0
      %860 = vmatprep.subr.mxu0 0.0
      %861 = vmatpush1.msra.mxu0 0.0
      %862 = vmatprep.subr.mxu0 0.0
      %863 = vmatpush1.msra.mxu0 0.0
      %864 = vmatprep.subr.mxu0 0.0
      %865 = vmatpush1.msra.mxu0 0.0
      %866 = vmatprep.subr.mxu0 0.0
      %867 = vmatpush1.msra.mxu0 0.0
      %868 = vmatprep.subr.mxu0 0.0
      %869 = vmatpush1.msra.mxu0 0.0
      %870 = vmatprep.subr.mxu0 0.0
      %871 = vmatpush1.msra.mxu0 0.0
      %872 = vmatprep.subr.mxu0 0.0
      %873 = vmatpush1.msra.mxu0 0.0
      %874 = vmatprep.subr.mxu0 0.0
      %875 = vmatpush1.msra.mxu0 0.0
      %876 = vmatprep.subr.mxu0 0.0
      %877 = vmatpush1.msra.mxu0 0.0
      %878 = vmatprep.subr.mxu0 0.0
      %879 = vmatpush1.msra.mxu0 0.0
      %880 = vmatprep.subr.mxu0 0.0
      %881 = vmatpush1.msra.mxu0 0.0
      %882 = vmatprep.subr.mxu0 0.0
      %883 = vmatpush1.msra.mxu0 0.0
      %884 = vmatprep.subr.mxu0 0.0
      %885 = vmatpush1.msra.mxu0 0.0
      %886 = vmatprep.subr.mxu0 0.0
      %887 = vmatpush1.msra.mxu0 0.0
      %888 = vmatprep.subr.mxu0 0.0
      %889 = vmatpush1.msra.mxu0 0.0
      %890 = vmatprep.subr.mxu0 0.0
      %891 = vmatpush1.msra.mxu0 0.0
      %892 = vmatprep.subr.mxu0 0.0
      %893 = vmatpush1.msra.mxu0 0.0
      %894 = vmatprep.subr.mxu0 0.0
      %895 = vmatpush1.msra.mxu0 0.0
      %896 = vmatprep.subr.mxu0 0.0
      %897 = vmatpush1.msra.mxu0 0.0
      %898 = vmatprep.mubr.f32.mxu0 0.0
      %899 = vmatmul.mubr.f32.gmra.mrb[0].mxu0 %v823
      %v900 = vpop.f32.mrb[0].mxu0
      %v901 = vadd.f32 %v804, %v900
      %v902 = vpop.f32.mrb[0].mxu0
      %903 = vmatprep.mubr.f32.mxu0 0.0
      %904 = vmatmul.mubr.f32.gmra.mrb[0].mxu0 %v826
      %v905 = vpop.f32.mrb[0].mxu0
      %v906 = vadd.f32 %v809, %v905
      %v907 = vpop.f32.mrb[0].mxu0
      %908 = vmatprep.mubr.f32.mxu0 0.0
      %909 = vmatmul.mubr.f32.gmra.mrb[0].mxu0 %v829
      %v910 = vpop.f32.mrb[0].mxu0
      %v911 = vadd.f32 %v814, %v910
      %v912 = vpop.f32.mrb[0].mxu0
      %913 = vmatprep.mubr.f32.mxu0 0.0
      %914 = vmatmul.mubr.f32.gmra.mrb[0].mxu0 %v832
      %v915 = vpop.f32.mrb[0].mxu0
      %v916 = vadd.f32 %v819, %v915
      %v917 = vpop.f32.mrb[0].mxu0
      %918 = vdwg.mxu0
      %v919 = vmax.f32 %v901, 0.0
      %v920 = vmax.f32 %v906, 0.0
      %v921 = vmax.f32 %v911, 0.0
      %v922 = vmax.f32 %v916, 0.0
      %v923 = vld [vmem:[%s7] sm:$0xff]
      %v924 = vld [vmem:[%s7 + $0x8] sm:$0xff]
      %v925 = vld [vmem:[%s7 + $0x10] sm:$0xff]
      %v926 = vld [vmem:[%s7 + $0x18] sm:$0xff]
      %v927 = vld [vmem:[%s8] sm:$0xff]
      %v928 = vld [vmem:[%s8 + $0x8] sm:$0xff]
      %v929 = vld [vmem:[%s8 + $0x10] sm:$0xff]
      %v930 = vld [vmem:[%s8 + $0x18] sm:$0xff]
      %932 = vset.pattern.permute.xlu0 0
      %933 = vperm.xlu0 %932, %v927
      %v934 = vpop.permute.xlu0 %933
      %937 = vset.pattern.permute.xlu0 0
      %938 = vperm.xlu0 %937, %v928
      %v939 = vpop.permute.xlu0 %938
      %942 = vset.pattern.permute.xlu0 0
      %943 = vperm.xlu0 %942, %v929
      %v944 = vpop.permute.xlu0 %943
      %947 = vset.pattern.permute.xlu0 0
      %948 = vperm.xlu0 %947, %v930
      %v949 = vpop.permute.xlu0 %948
      %vm951 = vcmask 261120
      %v953 = vsel %vm951, %v923, 0
      %v956 = vsel %vm951, %v924, 0
      %v959 = vsel %vm951, %v925, 0
      %v962 = vsel %vm951, %v926, 0
      %964 = vmatprep.subr.mxu0 0.0
      %965 = vmatpush1.msra.mxu0 %v919
      %966 = vmatprep.subr.mxu0 0.0
      %967 = vmatpush1.msra.mxu0 %v920
      %968 = vmatprep.subr.mxu0 0.0
      %969 = vmatpush1.msra.mxu0 %v921
      %970 = vmatprep.subr.mxu0 0.0
      %971 = vmatpush1.msra.mxu0 %v922
      %972 = vmatprep.subr.mxu0 0.0
      %973 = vmatpush1.msra.mxu0 0.0
      %974 = vmatprep.subr.mxu0 0.0
      %975 = vmatpush1.msra.mxu0 0.0
      %976 = vmatprep.subr.mxu0 0.0
      %977 = vmatpush1.msra.mxu0 0.0
      %978 = vmatprep.subr.mxu0 0.0
      %979 = vmatpush1.msra.mxu0 0.0
      %980 = vmatprep.subr.mxu0 0.0
      %981 = vmatpush1.msra.mxu0 0.0
      %982 = vmatprep.subr.mxu0 0.0
      %983 = vmatpush1.msra.mxu0 0.0
      %984 = vmatprep.subr.mxu0 0.0
      %985 = vmatpush1.msra.mxu0 0.0
      %986 = vmatprep.subr.mxu0 0.0
      %987 = vmatpush1.msra.mxu0 0.0
      %988 = vmatprep.subr.mxu0 0.0
      %989 = vmatpush1.msra.mxu0 0.0
      %990 = vmatprep.subr.mxu0 0.0
      %991 = vmatpush1.msra.mxu0 0.0
      %992 = vmatprep.subr.mxu0 0.0
      %993 = vmatpush1.msra.mxu0 0.0
      %994 = vmatprep.subr.mxu0 0.0
      %995 = vmatpush1.msra.mxu0 0.0
      %996 = vmatprep.subr.mxu0 0.0
      %997 = vmatpush1.msra.mxu0 0.0
      %998 = vmatprep.subr.mxu0 0.0
      %999 = vmatpush1.msra.mxu0 0.0
      %1000 = vmatprep.subr.mxu0 0.0
      %1001 = vmatpush1.msra.mxu0 0.0
      %1002 = vmatprep.subr.mxu0 0.0
      %1003 = vmatpush1.msra.mxu0 0.0
      %1004 = vmatprep.subr.mxu0 0.0
      %1005 = vmatpush1.msra.mxu0 0.0
      %1006 = vmatprep.subr.mxu0 0.0
      %1007 = vmatpush1.msra.mxu0 0.0
      %1008 = vmatprep.subr.mxu0 0.0
      %1009 = vmatpush1.msra.mxu0 0.0
      %1010 = vmatprep.subr.mxu0 0.0
      %1011 = vmatpush1.msra.mxu0 0.0
      %1012 = vmatprep.subr.mxu0 0.0
      %1013 = vmatpush1.msra.mxu0 0.0
      %1014 = vmatprep.subr.mxu0 0.0
      %1015 = vmatpush1.msra.mxu0 0.0
      %1016 = vmatprep.subr.mxu0 0.0
      %1017 = vmatpush1.msra.mxu0 0.0
      %1018 = vmatprep.subr.mxu0 0.0
      %1019 = vmatpush1.msra.mxu0 0.0
      %1020 = vmatprep.subr.mxu0 0.0
      %1021 = vmatpush1.msra.mxu0 0.0
      %1022 = vmatprep.subr.mxu0 0.0
      %1023 = vmatpush1.msra.mxu0 0.0
      %1024 = vmatprep.subr.mxu0 0.0
      %1025 = vmatpush1.msra.mxu0 0.0
      %1026 = vmatprep.subr.mxu0 0.0
      %1027 = vmatpush1.msra.mxu0 0.0
      %1028 = vmatprep.mubr.f32.mxu0 0.0
      %1029 = vmatmul.mubr.f32.gmra.mrb[0].mxu0 %v953
      %v1030 = vpop.f32.mrb[0].mxu0
      %v1031 = vadd.f32 %v934, %v1030
      %v1032 = vpop.f32.mrb[0].mxu0
      %1033 = vmatprep.mubr.f32.mxu0 0.0
      %1034 = vmatmul.mubr.f32.gmra.mrb[0].mxu0 %v956
      %v1035 = vpop.f32.mrb[0].mxu0
      %v1036 = vadd.f32 %v939, %v1035
      %v1037 = vpop.f32.mrb[0].mxu0
      %1038 = vmatprep.mubr.f32.mxu0 0.0
      %1039 = vmatmul.mubr.f32.gmra.mrb[0].mxu0 %v959
      %v1040 = vpop.f32.mrb[0].mxu0
      %v1041 = vadd.f32 %v944, %v1040
      %v1042 = vpop.f32.mrb[0].mxu0
      %1043 = vmatprep.mubr.f32.mxu0 0.0
      %1044 = vmatmul.mubr.f32.gmra.mrb[0].mxu0 %v962
      %v1045 = vpop.f32.mrb[0].mxu0
      %v1046 = vadd.f32 %v949, %v1045
      %v1047 = vpop.f32.mrb[0].mxu0
      %1048 = vdwg.mxu0
      %v1049 = vmax.f32 %v1031, 0.0
      %v1050 = vmax.f32 %v1036, 0.0
      %v1051 = vmax.f32 %v1041, 0.0
      %v1052 = vmax.f32 %v1046, 0.0
      %v1053 = vsel %vm821, %v919, 0.0
      %1054 = vadd.xlane.f32.xlu0 %v1053
      %v1055 = vpop.xlane.xlu0 %1054
      %v1056 = vsel %vm821, %v920, 0.0
      %1057 = vadd.xlane.f32.xlu0 %v1056
      %v1058 = vpop.xlane.xlu0 %1057
      %v1059 = vsel %vm821, %v921, 0.0
      %1060 = vadd.xlane.f32.xlu0 %v1059
      %v1061 = vpop.xlane.xlu0 %1060
      %v1062 = vsel %vm821, %v922, 0.0
      %1063 = vadd.xlane.f32.xlu0 %v1062
      %v1064 = vpop.xlane.xlu0 %1063
      %v1065 = vrcp.pop 16.0
      %v1066 = vmul.f32 %v1055, %v1065
      %v1067 = vmul.f32 %v1058, %v1065
      %v1068 = vmul.f32 %v1061, %v1065
      %v1069 = vmul.f32 %v1064, %v1065
      %v1070 = vld [vmem:[%s9] sm:$0xff]
      %v1071 = vld [vmem:[%s9 + $0x8] sm:$0xff]
      %v1072 = vld [vmem:[%s9 + $0x10] sm:$0xff]
      %v1073 = vld [vmem:[%s9 + $0x18] sm:$0xff]
      %v1075 = vsel %vm951, %v1070, 0
      %v1078 = vsel %vm951, %v1071, 0
      %v1081 = vsel %vm951, %v1072, 0
      %v1084 = vsel %vm951, %v1073, 0
      %1086 = vmatprep.subr.mxu0 0.0
      %1087 = vmatpush1.msra.mxu0 %v1066
      %1088 = vmatprep.subr.mxu0 0.0
      %1089 = vmatpush1.msra.mxu0 %v1067
      %1090 = vmatprep.subr.mxu0 0.0
      %1091 = vmatpush1.msra.mxu0 %v1068
      %1092 = vmatprep.subr.mxu0 0.0
      %1093 = vmatpush1.msra.mxu0 %v1069
      %1094 = vmatprep.subr.mxu0 0.0
      %1095 = vmatpush1.msra.mxu0 0.0
      %1096 = vmatprep.subr.mxu0 0.0
      %1097 = vmatpush1.msra.mxu0 0.0
      %1098 = vmatprep.subr.mxu0 0.0
      %1099 = vmatpush1.msra.mxu0 0.0
      %1100 = vmatprep.subr.mxu0 0.0
      %1101 = vmatpush1.msra.mxu0 0.0
      %1102 = vmatprep.subr.mxu0 0.0
      %1103 = vmatpush1.msra.mxu0 0.0
      %1104 = vmatprep.subr.mxu0 0.0
      %1105 = vmatpush1.msra.mxu0 0.0
      %1106 = vmatprep.subr.mxu0 0.0
      %1107 = vmatpush1.msra.mxu0 0.0
      %1108 = vmatprep.subr.mxu0 0.0
      %1109 = vmatpush1.msra.mxu0 0.0
      %1110 = vmatprep.subr.mxu0 0.0
      %1111 = vmatpush1.msra.mxu0 0.0
      %1112 = vmatprep.subr.mxu0 0.0
      %1113 = vmatpush1.msra.mxu0 0.0
      %1114 = vmatprep.subr.mxu0 0.0
      %1115 = vmatpush1.msra.mxu0 0.0
      %1116 = vmatprep.subr.mxu0 0.0
      %1117 = vmatpush1.msra.mxu0 0.0
      %1118 = vmatprep.subr.mxu0 0.0
      %1119 = vmatpush1.msra.mxu0 0.0
      %1120 = vmatprep.subr.mxu0 0.0
      %1121 = vmatpush1.msra.mxu0 0.0
      %1122 = vmatprep.subr.mxu0 0.0
      %1123 = vmatpush1.msra.mxu0 0.0
      %1124 = vmatprep.subr.mxu0 0.0
      %1125 = vmatpush1.msra.mxu0 0.0
      %1126 = vmatprep.subr.mxu0 0.0
      %1127 = vmatpush1.msra.mxu0 0.0
      %1128 = vmatprep.subr.mxu0 0.0
      %1129 = vmatpush1.msra.mxu0 0.0
      %1130 = vmatprep.subr.mxu0 0.0
      %1131 = vmatpush1.msra.mxu0 0.0
      %1132 = vmatprep.subr.mxu0 0.0
      %1133 = vmatpush1.msra.mxu0 0.0
      %1134 = vmatprep.subr.mxu0 0.0
      %1135 = vmatpush1.msra.mxu0 0.0
      %1136 = vmatprep.subr.mxu0 0.0
      %1137 = vmatpush1.msra.mxu0 0.0
      %1138 = vmatprep.subr.mxu0 0.0
      %1139 = vmatpush1.msra.mxu0 0.0
      %1140 = vmatprep.subr.mxu0 0.0
      %1141 = vmatpush1.msra.mxu0 0.0
      %1142 = vmatprep.subr.mxu0 0.0
      %1143 = vmatpush1.msra.mxu0 0.0
      %1144 = vmatprep.subr.mxu0 0.0
      %1145 = vmatpush1.msra.mxu0 0.0
      %1146 = vmatprep.subr.mxu0 0.0
      %1147 = vmatpush1.msra.mxu0 0.0
      %1148 = vmatprep.subr.mxu0 0.0
      %1149 = vmatpush1.msra.mxu0 0.0
      %1150 = vmatprep.mubr.f32.mxu0 0.0
      %1151 = vmatmul.mubr.f32.gmra.mrb[0].mxu0 %v1075
      %v1152 = vpop.f32.mrb[0].mxu0
      %v1153 = vadd.f32 0.0, %v1152
      %v1154 = vpop.f32.mrb[0].mxu0
      %1155 = vmatprep.mubr.f32.mxu0 0.0
      %1156 = vmatmul.mubr.f32.gmra.mrb[0].mxu0 %v1078
      %v1157 = vpop.f32.mrb[0].mxu0
      %v1158 = vadd.f32 0.0, %v1157
      %v1159 = vpop.f32.mrb[0].mxu0
      %1160 = vmatprep.mubr.f32.mxu0 0.0
      %1161 = vmatmul.mubr.f32.gmra.mrb[0].mxu0 %v1081
      %v1162 = vpop.f32.mrb[0].mxu0
      %v1163 = vadd.f32 0.0, %v1162
      %v1164 = vpop.f32.mrb[0].mxu0
      %1165 = vmatprep.mubr.f32.mxu0 0.0
      %1166 = vmatmul.mubr.f32.gmra.mrb[0].mxu0 %v1084
      %v1167 = vpop.f32.mrb[0].mxu0
      %v1168 = vadd.f32 0.0, %v1167
      %v1169 = vpop.f32.mrb[0].mxu0
      %1170 = vdwg.mxu0
      %v1171 = vsub.f32 0.0, %v1153
      %v1172 = vsub.f32 0.0, %v1158
      %v1173 = vsub.f32 0.0, %v1163
      %v1174 = vsub.f32 0.0, %v1168
      %v1175 = vmul.f32 %v1171, 1.442695
      %v1176 = vpow.pop %v1175
      %v1177 = vmul.f32 %v1172, 1.442695
      %v1178 = vpow.pop %v1177
      %v1179 = vmul.f32 %v1173, 1.442695
      %v1180 = vpow.pop %v1179
      %v1181 = vmul.f32 %v1174, 1.442695
      %v1182 = vpow.pop %v1181
      %v1183 = vadd.f32 %v1176, 1.0
      %v1184 = vadd.f32 %v1178, 1.0
      %v1185 = vadd.f32 %v1180, 1.0
      %v1186 = vadd.f32 %v1182, 1.0
      %v1187 = vrcp.pop %v1183
      %v1188 = vmul.f32 1.0, %v1187
      %v1189 = vrcp.pop %v1184
      %v1190 = vmul.f32 1.0, %v1189
      %v1191 = vrcp.pop %v1185
      %v1192 = vmul.f32 1.0, %v1191
      %v1193 = vrcp.pop %v1186
      %v1194 = vmul.f32 1.0, %v1193
      %1196 = vset.pattern.permute.xlu0 0
      %1197 = vperm.xlu0 %1196, %v1188
      %v1198 = vpop.permute.xlu0 %1197
      %1201 = vset.pattern.permute.xlu0 0
      %1202 = vperm.xlu0 %1201, %v1190
      %v1203 = vpop.permute.xlu0 %1202
      %1206 = vset.pattern.permute.xlu0 0
      %1207 = vperm.xlu0 %1206, %v1192
      %v1208 = vpop.permute.xlu0 %1207
      %1211 = vset.pattern.permute.xlu0 0
      %1212 = vperm.xlu0 %1211, %v1194
      %v1213 = vpop.permute.xlu0 %1212
      %v1215 = vmul.f32 %v1049, %v1198
      %v1216 = vmul.f32 %v1050, %v1203
      %v1217 = vmul.f32 %v1051, %v1208
      %v1218 = vmul.f32 %v1052, %v1213
      %v1219 = vld [vmem:[%s10] sm:$0xff]
      %v1220 = vld [vmem:[%s10 + $0x8] sm:$0xff]
      %v1221 = vld [vmem:[%s10 + $0x10] sm:$0xff]
      %v1222 = vld [vmem:[%s10 + $0x18] sm:$0xff]
      %v1223 = vld [vmem:[%s10 + $0x20] sm:$0x1]
      %v1224 = vld [vmem:[%s11] sm:$0xff]
      %v1225 = vld [vmem:[%s11 + $0x8] sm:$0xff]
      %v1226 = vld [vmem:[%s11 + $0x10] sm:$0xff]
      %v1227 = vld [vmem:[%s11 + $0x18] sm:$0xff]
      %v1228 = vld [vmem:[%s11 + $0x20] sm:$0x1]
      %1230 = vset.pattern.permute.xlu0 0
      %1231 = vperm.xlu0 %1230, %v1224
      %v1232 = vpop.permute.xlu0 %1231
      %1235 = vset.pattern.permute.xlu0 0
      %1236 = vperm.xlu0 %1235, %v1225
      %v1237 = vpop.permute.xlu0 %1236
      %1240 = vset.pattern.permute.xlu0 0
      %1241 = vperm.xlu0 %1240, %v1226
      %v1242 = vpop.permute.xlu0 %1241
      %1245 = vset.pattern.permute.xlu0 0
      %1246 = vperm.xlu0 %1245, %v1227
      %v1247 = vpop.permute.xlu0 %1246
      %1250 = vset.pattern.permute.xlu0 0
      %1251 = vperm.xlu0 %1250, %v1228
      %v1252 = vpop.permute.xlu0 %1251
      %v1255 = vsel %vm821, %v1219, 0
      %v1258 = vsel %vm821, %v1220, 0
      %v1261 = vsel %vm821, %v1221, 0
      %v1264 = vsel %vm821, %v1222, 0
      %v1267 = vsel %vm821, %v1223, 0
      %1269 = vmatprep.subr.mxu0 0.0
      %1270 = vmatpush1.msra.mxu0 %v701
      %1271 = vmatprep.subr.mxu0 0.0
      %1272 = vmatpush1.msra.mxu0 %v702
      %1273 = vmatprep.subr.mxu0 0.0
      %1274 = vmatpush1.msra.mxu0 0.0
      %1275 = vmatprep.subr.mxu0 0.0
      %1276 = vmatpush1.msra.mxu0 0.0
      %1277 = vmatprep.subr.mxu0 0.0
      %1278 = vmatpush1.msra.mxu0 0.0
      %1279 = vmatprep.subr.mxu0 0.0
      %1280 = vmatpush1.msra.mxu0 0.0
      %1281 = vmatprep.subr.mxu0 0.0
      %1282 = vmatpush1.msra.mxu0 0.0
      %1283 = vmatprep.subr.mxu0 0.0
      %1284 = vmatpush1.msra.mxu0 0.0
      %1285 = vmatprep.subr.mxu0 0.0
      %1286 = vmatpush1.msra.mxu0 0.0
      %1287 = vmatprep.subr.mxu0 0.0
      %1288 = vmatpush1.msra.mxu0 0.0
      %1289 = vmatprep.subr.mxu0 0.0
      %1290 = vmatpush1.msra.mxu0 0.0
      %1291 = vmatprep.subr.mxu0 0.0
      %1292 = vmatpush1.msra.mxu0 0.0
      %1293 = vmatprep.subr.mxu0 0.0
      %1294 = vmatpush1.msra.mxu0 0.0
      %1295 = vmatprep.subr.mxu0 0.0
      %1296 = vmatpush1.msra.mxu0 0.0
      %1297 = vmatprep.subr.mxu0 0.0
      %1298 = vmatpush1.msra.mxu0 0.0
      %1299 = vmatprep.subr.mxu0 0.0
      %1300 = vmatpush1.msra.mxu0 0.0
      %1301 = vmatprep.subr.mxu0 0.0
      %1302 = vmatpush1.msra.mxu0 0.0
      %1303 = vmatprep.subr.mxu0 0.0
      %1304 = vmatpush1.msra.mxu0 0.0
      %1305 = vmatprep.subr.mxu0 0.0
      %1306 = vmatpush1.msra.mxu0 0.0
      %1307 = vmatprep.subr.mxu0 0.0
      %1308 = vmatpush1.msra.mxu0 0.0
      %1309 = vmatprep.subr.mxu0 0.0
      %1310 = vmatpush1.msra.mxu0 0.0
      %1311 = vmatprep.subr.mxu0 0.0
      %1312 = vmatpush1.msra.mxu0 0.0
      %1313 = vmatprep.subr.mxu0 0.0
      %1314 = vmatpush1.msra.mxu0 0.0
      %1315 = vmatprep.subr.mxu0 0.0
      %1316 = vmatpush1.msra.mxu0 0.0
      %1317 = vmatprep.subr.mxu0 0.0
      %1318 = vmatpush1.msra.mxu0 0.0
      %1319 = vmatprep.subr.mxu0 0.0
      %1320 = vmatpush1.msra.mxu0 0.0
      %1321 = vmatprep.subr.mxu0 0.0
      %1322 = vmatpush1.msra.mxu0 0.0
      %1323 = vmatprep.subr.mxu0 0.0
      %1324 = vmatpush1.msra.mxu0 0.0
      %1325 = vmatprep.subr.mxu0 0.0
      %1326 = vmatpush1.msra.mxu0 0.0
      %1327 = vmatprep.subr.mxu0 0.0
      %1328 = vmatpush1.msra.mxu0 0.0
      %1329 = vmatprep.subr.mxu0 0.0
      %1330 = vmatpush1.msra.mxu0 0.0
      %1331 = vmatprep.subr.mxu0 0.0
      %1332 = vmatpush1.msra.mxu0 0.0
      %1333 = vmatprep.mubr.f32.mxu0 0.0
      %1334 = vmatmul.mubr.f32.gmra.mrb[0].mxu0 %v1255
      %v1335 = vpop.f32.mrb[0].mxu0
      %v1336 = vadd.f32 %v1232, %v1335
      %v1337 = vpop.f32.mrb[0].mxu0
      %1338 = vmatprep.mubr.f32.mxu0 0.0
      %1339 = vmatmul.mubr.f32.gmra.mrb[0].mxu0 %v1258
      %v1340 = vpop.f32.mrb[0].mxu0
      %v1341 = vadd.f32 %v1237, %v1340
      %v1342 = vpop.f32.mrb[0].mxu0
      %1343 = vmatprep.mubr.f32.mxu0 0.0
      %1344 = vmatmul.mubr.f32.gmra.mrb[0].mxu0 %v1261
      %v1345 = vpop.f32.mrb[0].mxu0
      %v1346 = vadd.f32 %v1242, %v1345
      %v1347 = vpop.f32.mrb[0].mxu0
      %1348 = vmatprep.mubr.f32.mxu0 0.0
      %1349 = vmatmul.mubr.f32.gmra.mrb[0].mxu0 %v1264
      %v1350 = vpop.f32.mrb[0].mxu0
      %v1351 = vadd.f32 %v1247, %v1350
      %v1352 = vpop.f32.mrb[0].mxu0
      %1353 = vmatprep.mubr.f32.mxu0 0.0
      %1354 = vmatmul.mubr.f32.gmra.mrb[0].mxu0 %v1267
      %v1355 = vpop.f32.mrb[0].mxu0
      %v1356 = vadd.f32 %v1252, %v1355
      %v1357 = vpop.f32.mrb[0].mxu0
      %1358 = vdwg.mxu0
      %v1359 = vld [vmem:[%s12] sm:$0xff]
      %v1360 = vld [vmem:[%s12 + $0x8] sm:$0xff]
      %v1361 = vld [vmem:[%s12 + $0x10] sm:$0xff]
      %v1362 = vld [vmem:[%s12 + $0x18] sm:$0xff]
      %v1363 = vld [vmem:[%s12 + $0x20] sm:$0x1]
      %v1365 = vsel %vm951, %v1359, 0
      %v1368 = vsel %vm951, %v1360, 0
      %v1371 = vsel %vm951, %v1361, 0
      %v1374 = vsel %vm951, %v1362, 0
      %v1377 = vsel %vm951, %v1363, 0
      %1379 = vmatprep.subr.mxu0 0.0
      %1380 = vmatpush1.msra.mxu0 %v1215
      %1381 = vmatprep.subr.mxu0 0.0
      %1382 = vmatpush1.msra.mxu0 %v1216
      %1383 = vmatprep.subr.mxu0 0.0
      %1384 = vmatpush1.msra.mxu0 %v1217
      %1385 = vmatprep.subr.mxu0 0.0
      %1386 = vmatpush1.msra.mxu0 %v1218
      %1387 = vmatprep.subr.mxu0 0.0
      %1388 = vmatpush1.msra.mxu0 0.0
      %1389 = vmatprep.subr.mxu0 0.0
      %1390 = vmatpush1.msra.mxu0 0.0
      %1391 = vmatprep.subr.mxu0 0.0
      %1392 = vmatpush1.msra.mxu0 0.0
      %1393 = vmatprep.subr.mxu0 0.0
      %1394 = vmatpush1.msra.mxu0 0.0
      %1395 = vmatprep.subr.mxu0 0.0
      %1396 = vmatpush1.msra.mxu0 0.0
      %1397 = vmatprep.subr.mxu0 0.0
      %1398 = vmatpush1.msra.mxu0 0.0
      %1399 = vmatprep.subr.mxu0 0.0
      %1400 = vmatpush1.msra.mxu0 0.0
      %1401 = vmatprep.subr.mxu0 0.0
      %1402 = vmatpush1.msra.mxu0 0.0
      %1403 = vmatprep.subr.mxu0 0.0
      %1404 = vmatpush1.msra.mxu0 0.0
      %1405 = vmatprep.subr.mxu0 0.0
      %1406 = vmatpush1.msra.mxu0 0.0
      %1407 = vmatprep.subr.mxu0 0.0
      %1408 = vmatpush1.msra.mxu0 0.0
      %1409 = vmatprep.subr.mxu0 0.0
      %1410 = vmatpush1.msra.mxu0 0.0
      %1411 = vmatprep.subr.mxu0 0.0
      %1412 = vmatpush1.msra.mxu0 0.0
      %1413 = vmatprep.subr.mxu0 0.0
      %1414 = vmatpush1.msra.mxu0 0.0
      %1415 = vmatprep.subr.mxu0 0.0
      %1416 = vmatpush1.msra.mxu0 0.0
      %1417 = vmatprep.subr.mxu0 0.0
      %1418 = vmatpush1.msra.mxu0 0.0
      %1419 = vmatprep.subr.mxu0 0.0
      %1420 = vmatpush1.msra.mxu0 0.0
      %1421 = vmatprep.subr.mxu0 0.0
      %1422 = vmatpush1.msra.mxu0 0.0
      %1423 = vmatprep.subr.mxu0 0.0
      %1424 = vmatpush1.msra.mxu0 0.0
      %1425 = vmatprep.subr.mxu0 0.0
      %1426 = vmatpush1.msra.mxu0 0.0
      %1427 = vmatprep.subr.mxu0 0.0
      %1428 = vmatpush1.msra.mxu0 0.0
      %1429 = vmatprep.subr.mxu0 0.0
      %1430 = vmatpush1.msra.mxu0 0.0
      %1431 = vmatprep.subr.mxu0 0.0
      %1432 = vmatpush1.msra.mxu0 0.0
      %1433 = vmatprep.subr.mxu0 0.0
      %1434 = vmatpush1.msra.mxu0 0.0
      %1435 = vmatprep.subr.mxu0 0.0
      %1436 = vmatpush1.msra.mxu0 0.0
      %1437 = vmatprep.subr.mxu0 0.0
      %1438 = vmatpush1.msra.mxu0 0.0
      %1439 = vmatprep.subr.mxu0 0.0
      %1440 = vmatpush1.msra.mxu0 0.0
      %1441 = vmatprep.subr.mxu0 0.0
      %1442 = vmatpush1.msra.mxu0 0.0
      %1443 = vmatprep.mubr.f32.mxu0 0.0
      %1444 = vmatmul.mubr.f32.gmra.mrb[0].mxu0 %v1365
      %v1445 = vpop.f32.mrb[0].mxu0
      %v1446 = vadd.f32 0.0, %v1445
      %v1447 = vpop.f32.mrb[0].mxu0
      %1448 = vmatprep.mubr.f32.mxu0 0.0
      %1449 = vmatmul.mubr.f32.gmra.mrb[0].mxu0 %v1368
      %v1450 = vpop.f32.mrb[0].mxu0
      %v1451 = vadd.f32 0.0, %v1450
      %v1452 = vpop.f32.mrb[0].mxu0
      %1453 = vmatprep.mubr.f32.mxu0 0.0
      %1454 = vmatmul.mubr.f32.gmra.mrb[0].mxu0 %v1371
      %v1455 = vpop.f32.mrb[0].mxu0
      %v1456 = vadd.f32 0.0, %v1455
      %v1457 = vpop.f32.mrb[0].mxu0
      %1458 = vmatprep.mubr.f32.mxu0 0.0
      %1459 = vmatmul.mubr.f32.gmra.mrb[0].mxu0 %v1374
      %v1460 = vpop.f32.mrb[0].mxu0
      %v1461 = vadd.f32 0.0, %v1460
      %v1462 = vpop.f32.mrb[0].mxu0
      %1463 = vmatprep.mubr.f32.mxu0 0.0
      %1464 = vmatmul.mubr.f32.gmra.mrb[0].mxu0 %v1377
      %v1465 = vpop.f32.mrb[0].mxu0
      %v1466 = vadd.f32 0.0, %v1465
      %v1467 = vpop.f32.mrb[0].mxu0
      %1468 = vdwg.mxu0
      %v1469 = vld [vmem:[%s13] sm:$0xff]
      %v1470 = vld [vmem:[%s13 + $0x8] sm:$0xff]
      %v1471 = vld [vmem:[%s13 + $0x10] sm:$0xff]
      %v1472 = vld [vmem:[%s13 + $0x18] sm:$0xff]
      %v1473 = vld [vmem:[%s13 + $0x20] sm:$0xff]
      %v1474 = vld [vmem:[%s13 + $0x28] sm:$0xff]
      %v1475 = vld [vmem:[%s13 + $0x30] sm:$0xff]
      %v1476 = vld [vmem:[%s13 + $0x38] sm:$0xff]
      %v1477 = vld [vmem:[%s13 + $0x40] sm:$0xff]
      %v1478 = vld [vmem:[%s13 + $0x48] sm:$0xff]
      %v1479 = vld [vmem:[%s13 + $0x50] sm:$0xff]
      %v1480 = vld [vmem:[%s13 + $0x58] sm:$0xff]
      %v1481 = vld [vmem:[%s13 + $0x60] sm:$0xff]
      %v1482 = vld [vmem:[%s13 + $0x68] sm:$0xff]
      %v1483 = vld [vmem:[%s13 + $0x70] sm:$0xff]
      %v1484 = vld [vmem:[%s13 + $0x78] sm:$0xff]
      %v1485 = vld [vmem:[%s14] sm:$0xff]
      %v1486 = vld [vmem:[%s14 + $0x8] sm:$0xff]
      %v1487 = vld [vmem:[%s14 + $0x10] sm:$0xff]
      %v1488 = vld [vmem:[%s14 + $0x18] sm:$0xff]
      %v1490 = vsel %vm821, %v1446, 0
      %v1493 = vsel %vm821, %v1451, 0
      %v1496 = vsel %vm821, %v1456, 0
      %v1499 = vsel %vm821, %v1461, 0
      %v1502 = vsel %vm821, %v1466, 0
      %1504 = vmatprep.subr.mxu0 %v1486
      %1505 = vmatpush1.msra.mxu0 %v1485
      %1506 = vmatprep.subr.mxu0 %v1488
      %1507 = vmatpush1.msra.mxu0 %v1487
      %1508 = vmatprep.subr.mxu0 0.0
      %1509 = vmatpush1.msra.mxu0 0.0
      %1510 = vmatprep.subr.mxu0 0.0
      %1511 = vmatpush1.msra.mxu0 0.0
      %1512 = vmatprep.subr.mxu0 0.0
      %1513 = vmatpush1.msra.mxu0 0.0
      %1514 = vmatprep.subr.mxu0 0.0
      %1515 = vmatpush1.msra.mxu0 0.0
      %1516 = vmatprep.subr.mxu0 0.0
      %1517 = vmatpush1.msra.mxu0 0.0
      %1518 = vmatprep.subr.mxu0 0.0
      %1519 = vmatpush1.msra.mxu0 0.0
      %1520 = vmatprep.subr.mxu0 0.0
      %1521 = vmatpush1.msra.mxu0 0.0
      %1522 = vmatprep.subr.mxu0 0.0
      %1523 = vmatpush1.msra.mxu0 0.0
      %1524 = vmatprep.subr.mxu0 0.0
      %1525 = vmatpush1.msra.mxu0 0.0
      %1526 = vmatprep.subr.mxu0 0.0
      %1527 = vmatpush1.msra.mxu0 0.0
      %1528 = vmatprep.subr.mxu0 0.0
      %1529 = vmatpush1.msra.mxu0 0.0
      %1530 = vmatprep.subr.mxu0 0.0
      %1531 = vmatpush1.msra.mxu0 0.0
      %1532 = vmatprep.subr.mxu0 0.0
      %1533 = vmatpush1.msra.mxu0 0.0
      %1534 = vmatprep.subr.mxu0 0.0
      %1535 = vmatpush1.msra.mxu0 0.0
      %1536 = vmatprep.subr.mxu0 0.0
      %1537 = vmatpush1.msra.mxu0 0.0
      %1538 = vmatprep.subr.mxu0 0.0
      %1539 = vmatpush1.msra.mxu0 0.0
      %1540 = vmatprep.subr.mxu0 0.0
      %1541 = vmatpush1.msra.mxu0 0.0
      %1542 = vmatprep.subr.mxu0 0.0
      %1543 = vmatpush1.msra.mxu0 0.0
      %1544 = vmatprep.subr.mxu0 0.0
      %1545 = vmatpush1.msra.mxu0 0.0
      %1546 = vmatprep.subr.mxu0 0.0
      %1547 = vmatpush1.msra.mxu0 0.0
      %1548 = vmatprep.subr.mxu0 0.0
      %1549 = vmatpush1.msra.mxu0 0.0
      %1550 = vmatprep.subr.mxu0 0.0
      %1551 = vmatpush1.msra.mxu0 0.0
      %1552 = vmatprep.subr.mxu0 0.0
      %1553 = vmatpush1.msra.mxu0 0.0
      %1554 = vmatprep.subr.mxu0 0.0
      %1555 = vmatpush1.msra.mxu0 0.0
      %1556 = vmatprep.subr.mxu0 0.0
      %1557 = vmatpush1.msra.mxu0 0.0
      %1558 = vmatprep.subr.mxu0 0.0
      %1559 = vmatpush1.msra.mxu0 0.0
      %1560 = vmatprep.subr.mxu0 0.0
      %1561 = vmatpush1.msra.mxu0 0.0
      %1562 = vmatprep.subr.mxu0 0.0
      %1563 = vmatpush1.msra.mxu0 0.0
      %1564 = vmatprep.subr.mxu0 0.0
      %1565 = vmatpush1.msra.mxu0 0.0
      %1566 = vmatprep.subr.mxu0 0.0
      %1567 = vmatpush1.msra.mxu0 0.0
      %1568 = vmatprep.mubr.f32.mxu0 0.0
      %1569 = vmatmul.mubr.f32.gmra.mrb[0].mxu0 %v1490
      %v1570 = vpop.f32.mrb[0].mxu0
      %v1571 = vadd.f32 0.0, %v1570
      %v1572 = vpop.f32.mrb[0].mxu0
      %v1573 = vadd.f32 0.0, %v1572
      %1574 = vmatprep.mubr.f32.mxu0 0.0
      %1575 = vmatmul.mubr.f32.gmra.mrb[0].mxu0 %v1493
      %v1576 = vpop.f32.mrb[0].mxu0
      %v1577 = vadd.f32 0.0, %v1576
      %v1578 = vpop.f32.mrb[0].mxu0
      %v1579 = vadd.f32 0.0, %v1578
      %1580 = vmatprep.mubr.f32.mxu0 0.0
      %1581 = vmatmul.mubr.f32.gmra.mrb[0].mxu0 %v1496
      %v1582 = vpop.f32.mrb[0].mxu0
      %v1583 = vadd.f32 0.0, %v1582
      %v1584 = vpop.f32.mrb[0].mxu0
      %v1585 = vadd.f32 0.0, %v1584
      %1586 = vmatprep.mubr.f32.mxu0 0.0
      %1587 = vmatmul.mubr.f32.gmra.mrb[0].mxu0 %v1499
      %v1588 = vpop.f32.mrb[0].mxu0
      %v1589 = vadd.f32 0.0, %v1588
      %v1590 = vpop.f32.mrb[0].mxu0
      %v1591 = vadd.f32 0.0, %v1590
      %1592 = vmatprep.mubr.f32.mxu0 0.0
      %1593 = vmatmul.mubr.f32.gmra.mrb[0].mxu0 %v1502
      %v1594 = vpop.f32.mrb[0].mxu0
      %v1595 = vadd.f32 0.0, %v1594
      %v1596 = vpop.f32.mrb[0].mxu0
      %v1597 = vadd.f32 0.0, %v1596
      %1598 = vdwg.mxu0
      %v1600 = vsel %vm711, %v1336, 0
      %v1603 = vsel %vm711, %v1341, 0
      %v1606 = vsel %vm711, %v1346, 0
      %v1609 = vsel %vm711, %v1351, 0
      %v1612 = vsel %vm711, %v1356, 0
      %1614 = vmatprep.subr.mxu0 %v1470
      %1615 = vmatpush1.msra.mxu0 %v1469
      %1616 = vmatprep.subr.mxu0 %v1472
      %1617 = vmatpush1.msra.mxu0 %v1471
      %1618 = vmatprep.subr.mxu0 %v1474
      %1619 = vmatpush1.msra.mxu0 %v1473
      %1620 = vmatprep.subr.mxu0 %v1476
      %1621 = vmatpush1.msra.mxu0 %v1475
      %1622 = vmatprep.subr.mxu0 %v1478
      %1623 = vmatpush1.msra.mxu0 %v1477
      %1624 = vmatprep.subr.mxu0 %v1480
      %1625 = vmatpush1.msra.mxu0 %v1479
      %1626 = vmatprep.subr.mxu0 %v1482
      %1627 = vmatpush1.msra.mxu0 %v1481
      %1628 = vmatprep.subr.mxu0 %v1484
      %1629 = vmatpush1.msra.mxu0 %v1483
      %1630 = vmatprep.subr.mxu0 0.0
      %1631 = vmatpush1.msra.mxu0 0.0
      %1632 = vmatprep.subr.mxu0 0.0
      %1633 = vmatpush1.msra.mxu0 0.0
      %1634 = vmatprep.subr.mxu0 0.0
      %1635 = vmatpush1.msra.mxu0 0.0
      %1636 = vmatprep.subr.mxu0 0.0
      %1637 = vmatpush1.msra.mxu0 0.0
      %1638 = vmatprep.subr.mxu0 0.0
      %1639 = vmatpush1.msra.mxu0 0.0
      %1640 = vmatprep.subr.mxu0 0.0
      %1641 = vmatpush1.msra.mxu0 0.0
      %1642 = vmatprep.subr.mxu0 0.0
      %1643 = vmatpush1.msra.mxu0 0.0
      %1644 = vmatprep.subr.mxu0 0.0
      %1645 = vmatpush1.msra.mxu0 0.0
      %1646 = vmatprep.subr.mxu0 0.0
      %1647 = vmatpush1.msra.mxu0 0.0
      %1648 = vmatprep.subr.mxu0 0.0
      %1649 = vmatpush1.msra.mxu0 0.0
      %1650 = vmatprep.subr.mxu0 0.0
      %1651 = vmatpush1.msra.mxu0 0.0
      %1652 = vmatprep.subr.mxu0 0.0
      %1653 = vmatpush1.msra.mxu0 0.0
      %1654 = vmatprep.subr.mxu0 0.0
      %1655 = vmatpush1.msra.mxu0 0.0
      %1656 = vmatprep.subr.mxu0 0.0
      %1657 = vmatpush1.msra.mxu0 0.0
      %1658 = vmatprep.subr.mxu0 0.0
      %1659 = vmatpush1.msra.mxu0 0.0
      %1660 = vmatprep.subr.mxu0 0.0
      %1661 = vmatpush1.msra.mxu0 0.0
      %1662 = vmatprep.subr.mxu0 0.0
      %1663 = vmatpush1.msra.mxu0 0.0
      %1664 = vmatprep.subr.mxu0 0.0
      %1665 = vmatpush1.msra.mxu0 0.0
      %1666 = vmatprep.subr.mxu0 0.0
      %1667 = vmatpush1.msra.mxu0 0.0
      %1668 = vmatprep.subr.mxu0 0.0
      %1669 = vmatpush1.msra.mxu0 0.0
      %1670 = vmatprep.subr.mxu0 0.0
      %1671 = vmatpush1.msra.mxu0 0.0
      %1672 = vmatprep.subr.mxu0 0.0
      %1673 = vmatpush1.msra.mxu0 0.0
      %1674 = vmatprep.subr.mxu0 0.0
      %1675 = vmatpush1.msra.mxu0 0.0
      %1676 = vmatprep.subr.mxu0 0.0
      %1677 = vmatpush1.msra.mxu0 0.0
      %1678 = vmatprep.mubr.f32.mxu0 0.0
      %1679 = vmatmul.mubr.f32.gmra.mrb[0].mxu0 %v1600
      %v1680 = vpop.f32.mrb[0].mxu0
      %v1681 = vadd.f32 %v1571, %v1680
      %v1682 = vpop.f32.mrb[0].mxu0
      %v1683 = vadd.f32 %v1573, %v1682
      %1684 = vmatprep.mubr.f32.mxu0 0.0
      %1685 = vmatmul.mubr.f32.gmra.mrb[0].mxu0 %v1603
      %v1686 = vpop.f32.mrb[0].mxu0
      %v1687 = vadd.f32 %v1577, %v1686
      %v1688 = vpop.f32.mrb[0].mxu0
      %v1689 = vadd.f32 %v1579, %v1688
      %1690 = vmatprep.mubr.f32.mxu0 0.0
      %1691 = vmatmul.mubr.f32.gmra.mrb[0].mxu0 %v1606
      %v1692 = vpop.f32.mrb[0].mxu0
      %v1693 = vadd.f32 %v1583, %v1692
      %v1694 = vpop.f32.mrb[0].mxu0
      %v1695 = vadd.f32 %v1585, %v1694
      %1696 = vmatprep.mubr.f32.mxu0 0.0
      %1697 = vmatmul.mubr.f32.gmra.mrb[0].mxu0 %v1609
      %v1698 = vpop.f32.mrb[0].mxu0
      %v1699 = vadd.f32 %v1589, %v1698
      %v1700 = vpop.f32.mrb[0].mxu0
      %v1701 = vadd.f32 %v1591, %v1700
      %1702 = vmatprep.mubr.f32.mxu0 0.0
      %1703 = vmatmul.mubr.f32.gmra.mrb[0].mxu0 %v1612
      %v1704 = vpop.f32.mrb[0].mxu0
      %v1705 = vadd.f32 %v1595, %v1704
      %v1706 = vpop.f32.mrb[0].mxu0
      %v1707 = vadd.f32 %v1597, %v1706
      %1708 = vdwg.mxu0
      %1709 = vst [vmem:[%s494] sm:$0xff] %v1681
      %1710 = vst [vmem:[%s494 + $0x8] sm:$0xff] %v1683
      %1711 = vst [vmem:[%s494 + $0x10] sm:$0xff] %v1687
      %1712 = vst [vmem:[%s494 + $0x18] sm:$0xff] %v1689
      %1713 = vst [vmem:[%s494 + $0x20] sm:$0xff] %v1693
      %1714 = vst [vmem:[%s494 + $0x28] sm:$0xff] %v1695
      %1715 = vst [vmem:[%s494 + $0x30] sm:$0xff] %v1699
      %1716 = vst [vmem:[%s494 + $0x38] sm:$0xff] %v1701
      %1717 = vst [vmem:[%s494 + $0x40] sm:$0x1] %v1705
      %1718 = vst [vmem:[%s494 + $0x48] sm:$0x1] %v1707
      %p1719 = scmp.lt.s32.totalorder %s26, 1
      %s1720 = scalar_select %p1719, %s26, 1
      %s1721 = smul.addr %s1720, 10
      %s1722 = smul.addr %s1721, 8
      %s1723 = scalar_lea.vmem %s15, %s1722
      // Predicated region
      $region81: #{lraspp_forward.1} parent=79 // pred_check
        %p1724 = pneg %p364
      $region82: #{lraspp_forward.1} parent=79 // pred_check_branch
        %1726 = sbr.rel (%p1724) target = $region84
      $region83: #{lraspp_forward.1} parent=79 // pred_region
        _
      $region84: #{lraspp_forward.1} parent=79 // pred_fallthru
        _
    $region80: #{lraspp_forward.1} parent=5 // pred_fallthru
      _
    %p1727 = scmp.le.s32.totalorder 2, %s21
    // Predicated region
    $region85: #{lraspp_forward.1} parent=5 // pred_check
      %p1728 = pneg %p1727
    $region86: #{lraspp_forward.1} parent=5 // pred_check_branch
      %1730 = sbr.rel (%p1728) target = $region88
    $region87: #{lraspp_forward.1} parent=5 // pred_region
      %s1731 = ssub.s32 %s21, 2
      // Predicated region
      $region89: #{lraspp_forward.1} parent=87 // pred_check
        %p1732 = pneg %p370
      $region90: #{lraspp_forward.1} parent=87 // pred_check_branch
        %1734 = sbr.rel (%p1732) target = $region92
      $region91: #{lraspp_forward.1} parent=87 // pred_region
        %p1735 = scmp.lt.s32.totalorder %s27, 1
        %s1736 = scalar_select %p1735, %s27, 1
        %s1737 = smul.addr %s1736, 10
        %s1738 = smul.addr %s1737, 8
        %s1739 = scalar_lea.vmem %s15, %s1738
      $region92: #{lraspp_forward.1} parent=87 // pred_fallthru
        _
    $region88: #{lraspp_forward.1} parent=5 // pred_fallthru
      _
  $region6: #{lraspp_forward.1} parent=0 // loop_footer
    %s25 = sadd.s32 1, %s21
  $region7: #{lraspp_forward.1} parent=0 // loop_footer_branch
    %20 = sbr.rel target = $region3
  $region8: #{lraspp_forward.1} parent=0 // loop_exit
    _

</llo_original>
